<compile_context>
chip_gen: v5e
topology: v5e:2x2
jax: 0.10.0
libtpu: 0.0.40
codegen_flags: <defaults>
</compile_context>

<pallas_src>
import numpy as np
import jax
import jax.numpy as jnp
from jax.experimental import pallas as pl
from jax.experimental.pallas import tpu as pltpu

# ---------------------------------------------------------------------------
# SMPL-X kinematic tree (55 joints)
# ---------------------------------------------------------------------------
SMPLX_PARENTS = np.array(
    [-1, 0, 0, 0, 1, 2, 3, 4, 5, 6, 7, 8, 9, 9, 9, 12, 13, 14, 16, 17, 18, 19,
     15, 15, 15,
     20, 25, 26, 20, 28, 29, 20, 31, 32, 20, 34, 35, 20, 37, 38,
     21, 40, 41, 21, 43, 44, 21, 46, 47, 21, 49, 50, 21, 52, 53],
    dtype=np.int32)
NUM_JOINTS = SMPLX_PARENTS.shape[0]          # 55
J_PAD = 64                                   # pad J to a clean MXU tile width


def _kinematic_levels(parents):
    depth = np.zeros(parents.shape[0], dtype=np.int64)
    for i in range(1, parents.shape[0]):
        depth[i] = depth[parents[i]] + 1
    return [np.nonzero(depth == d)[0].astype(np.int32)
            for d in range(1, int(depth.max()) + 1)]


SMPLX_LEVELS = _kinematic_levels(SMPLX_PARENTS)   # ~10 levels


# ---------------------------------------------------------------------------
# Pallas kernels
# ---------------------------------------------------------------------------
def _blend_kernel(shape_c_ref, pose_f_ref, vtpl_ref, sdirs_ref, pdirs_ref,
                  vshaped_ref, vposed_ref):
    # v_shaped = v_template + shape_comp @ shape_dirs        (bf16 in, f32 acc)
    # v_posed  = v_shaped  + pose_feat  @ pose_dirs
    v_shaped = vtpl_ref[...] + jnp.dot(
        shape_c_ref[...], sdirs_ref[...], preferred_element_type=jnp.float32)
    vshaped_ref[...] = v_shaped
    vposed_ref[...] = v_shaped + jnp.dot(
        pose_f_ref[...], pdirs_ref[...], preferred_element_type=jnp.float32)


def pallas_fused_blend(shape_comp, pose_feat, v_template_row, shape_dirs,
                       pose_dirs, tile_n=2048):
    """shape_comp (B,Ks) bf16, pose_feat (B,Kp) bf16, v_template_row (1,3V) f32,
    shape_dirs (Ks,3V) bf16, pose_dirs (Kp,3V) bf16 -> (v_shaped, v_posed) (B,3V) f32.
    Tiled over the 3V lane axis (tile must divide 3V; multiple of 128)."""
    B, Ks = shape_comp.shape
    Kp = pose_feat.shape[1]
    N = shape_dirs.shape[1]
    tn = N if N <= tile_n else tile_n
    assert N % tn == 0 and tn % 128 == 0, "blend tile must divide 3V and be a multiple of 128"
    grid = (N // tn,)
    return pl.pallas_call(
        _blend_kernel,
        out_shape=(jax.ShapeDtypeStruct((B, N), jnp.float32),
                   jax.ShapeDtypeStruct((B, N), jnp.float32)),
        grid=grid,
        in_specs=[pl.BlockSpec((B, Ks), lambda n: (0, 0)),
                  pl.BlockSpec((B, Kp), lambda n: (0, 0)),
                  pl.BlockSpec((1, tn), lambda n: (0, n)),
                  pl.BlockSpec((Ks, tn), lambda n: (0, n)),
                  pl.BlockSpec((Kp, tn), lambda n: (0, n))],
        out_specs=(pl.BlockSpec((B, tn), lambda n: (0, n)),
                   pl.BlockSpec((B, tn), lambda n: (0, n))),
        compiler_params=pltpu.CompilerParams(
            dimension_semantics=("parallel",)),
    )(shape_comp, pose_feat, v_template_row, shape_dirs, pose_dirs)


def _jreg_kernel(v_ref, jregT_ref, out_ref):
    # out (B*3, J_PAD) accumulates over V tiles:  v_planar @ J_regressor^T
    @pl.when(pl.program_id(0) == 0)
    def _():
        out_ref[...] = jnp.zeros_like(out_ref)
    out_ref[...] += jnp.dot(v_ref[...], jregT_ref[...],
                            preferred_element_type=jnp.float32)


def pallas_joint_regress(v_planar_2d, jregT, tile_v=512):
    """v_planar_2d (B*3, V) f32, jregT (V, J_PAD) f32 -> (B*3, J_PAD) f32.
    tile_v must divide V (multiple of 128)."""
    M, V = v_planar_2d.shape
    Jp = jregT.shape[1]
    tv = V if V <= tile_v else tile_v
    assert V % tv == 0 and tv % 128 == 0, "jreg tile must divide V and be a multiple of 128"
    return pl.pallas_call(
        _jreg_kernel,
        out_shape=jax.ShapeDtypeStruct((M, Jp), jnp.float32),
        grid=(V // tv,),
        in_specs=[pl.BlockSpec((M, tv), lambda k: (0, k)),
                  pl.BlockSpec((tv, Jp), lambda k: (k, 0))],
        out_specs=pl.BlockSpec((M, Jp), lambda k: (0, 0)),
        compiler_params=pltpu.CompilerParams(
            dimension_semantics=("arbitrary",)),
    )(v_planar_2d, jregT)


def _skin_kernel(w_ref, a_ref, vp_ref, out_ref):
    # T = A^T[b] @ W^T -> (16, TV): per-vertex row-major 4x4, lane-dense on V.
    T = jnp.dot(a_ref[0], w_ref[...], preferred_element_type=jnp.float32)
    vx = vp_ref[0, 0:1, :]
    vy = vp_ref[0, 1:2, :]
    vz = vp_ref[0, 2:3, :]
    # f32 VPU transform apply, single unmasked (3, TV) lane-dense store.
    ox = T[0:1] * vx + T[1:2] * vy + T[2:3] * vz + T[3:4]
    oy = T[4:5] * vx + T[5:6] * vy + T[6:7] * vz + T[7:8]
    oz = T[8:9] * vx + T[9:10] * vy + T[10:11] * vz + T[11:12]
    out_ref[0] = jnp.concatenate([ox, oy, oz], axis=0)


def pallas_skin(weights_T, A_T, v_posed_planar, tile_v=1024):
    """weights_T (J_PAD, V) f32, A_T (B, 16, J_PAD) f32, v_posed_planar (B, 3, V) f32
    -> (B, 3, V) f32.  tile_v must divide V (multiple of 128)."""
    B, _, V = v_posed_planar.shape
    Jp = weights_T.shape[0]
    tv = V if V <= tile_v else tile_v
    assert V % tv == 0 and tv % 128 == 0, "skin tile must divide V and be a multiple of 128"
    return pl.pallas_call(
        _skin_kernel,
        out_shape=jax.ShapeDtypeStruct((B, 3, V), jnp.float32),
        grid=(B, V // tv),
        in_specs=[pl.BlockSpec((Jp, tv), lambda b, n: (0, n)),
                  pl.BlockSpec((1, 16, Jp), lambda b, n: (b, 0, 0)),
                  pl.BlockSpec((1, 3, tv), lambda b, n: (b, 0, n))],
        out_specs=pl.BlockSpec((1, 3, tv), lambda b, n: (b, 0, n)),
        compiler_params=pltpu.CompilerParams(
            dimension_semantics=("parallel", "parallel")),
    )(weights_T, A_T, v_posed_planar)


# ---------------------------------------------------------------------------
# Plain-JAX glue (rodrigues, kinematic chain, landmarks)
# ---------------------------------------------------------------------------
def batch_rodrigues(rot_vecs):
    N = rot_vecs.shape[0]
    dtype = rot_vecs.dtype
    angle = jnp.linalg.norm(rot_vecs + 1e-8, axis=1, keepdims=True)      # (N,1)
    rot_dir = rot_vecs / angle
    cos = jnp.cos(angle)[:, None, :]
    sin = jnp.sin(angle)[:, None, :]
    rx, ry, rz = rot_dir[:, 0:1], rot_dir[:, 1:2], rot_dir[:, 2:3]
    zeros = jnp.zeros((N, 1), dtype=dtype)
    K = jnp.concatenate([zeros, -rz, ry, rz, zeros, -rx, -ry, rx, zeros],
                        axis=1).reshape(N, 3, 3)
    ident = jnp.eye(3, dtype=dtype)[None]
    return ident + sin * K + (1.0 - cos) * jnp.matmul(K, K)


def transform_mat(R, t):
    N = R.shape[0]
    bottom = jnp.broadcast_to(jnp.array([0., 0., 0., 1.], dtype=R.dtype),
                              (N, 1, 4))
    return jnp.concatenate([jnp.concatenate([R, t], axis=2), bottom], axis=1)


def batch_rigid_transform(rot_mats, joints, parents, levels):
    """Depth-leveled kinematic chain: one batched 4x4 compose per tree level."""
    B, Jn = joints.shape[:2]
    joints = joints[..., None]                                            # (B,J,3,1)
    rel = joints.at[:, 1:].add(-joints[:, parents[1:]])
    tm = transform_mat(rot_mats.reshape(-1, 3, 3),
                       rel.reshape(-1, 3, 1)).reshape(B, Jn, 4, 4)
    transforms = jnp.zeros((B, Jn, 4, 4), tm.dtype)
    transforms = transforms.at[:, 0].set(tm[:, 0])
    for lvl in levels:                                                    # ~10 levels
        par = parents[lvl]
        transforms = transforms.at[:, lvl].set(
            jnp.matmul(transforms[:, par], tm[:, lvl]))
    posed_joints = transforms[:, :, :3, 3]
    joints_homo = jnp.concatenate(
        [joints, jnp.zeros((B, Jn, 1, 1), joints.dtype)], axis=2)
    last_col = jnp.matmul(transforms, joints_homo)                        # (B,J,4,1)
    rel_transforms = transforms - jnp.concatenate(
        [jnp.zeros((B, Jn, 4, 3), transforms.dtype), last_col], axis=3)
    return posed_joints, rel_transforms


def vertices2landmarks(vertices, faces, lmk_faces_idx, lmk_bary_coords):
    B = vertices.shape[0]
    lmk_faces = faces[lmk_faces_idx]                                      # (B,L,3)
    batch_idx = jnp.arange(B)[:, None, None]
    lmk_vertices = vertices[batch_idx, lmk_faces]                         # (B,L,3,3)
    return jnp.einsum('blfi,blf->bli', lmk_vertices, lmk_bary_coords)


# ---------------------------------------------------------------------------
# ExpBodyModel forward
# ---------------------------------------------------------------------------
def exp_body_forward(params, root_orient, pose_body, pose_hand, pose_jaw,
                     pose_eye, betas, trans, expression, use_pallas=True,
                     blend_tile=2048, skin_tile=1024, jreg_tile=512):
    B = betas.shape[0]
    V = params['v_template'].shape[0]
    Jn = params['J_regressor'].shape[0]

    # --- hand PCA (is_hand_pca=True, num_hand_pca=6) ---
    n_h = pose_hand.shape[1] // 2
    left = params['left_hand_mean'][None, :] + pose_hand[:, :n_h] @ params['left_hand_components']
    right = params['right_hand_mean'][None, :] + pose_hand[:, n_h:] @ params['right_hand_components']
    pose_hand_full = jnp.concatenate([left, right], axis=1)               # (B,90)

    # pose2rot == True path (2-D pose inputs)
    full_pose = jnp.concatenate(
        [root_orient, pose_body, pose_jaw, pose_eye, pose_hand_full], axis=1)   # (B,165)
    shape_components = jnp.concatenate(
        [betas, params['fe_scale'] * expression], axis=-1)                # (B,20)

    rot_mats = batch_rodrigues(full_pose.reshape(-1, 3)).reshape(B, Jn, 3, 3)
    ident = jnp.eye(3, dtype=jnp.float32)
    pose_feature = (rot_mats[:, 1:] - ident).reshape(B, (Jn - 1) * 9)     # (B,486)

    shapedirs_full = jnp.concatenate(
        [params['shapedirs'], params['exprdirs']], axis=-1)               # (V,3,20)

    if use_pallas:
        # Derived constants in planar / padded / bf16 form.
        # NOTE: in production these are prepared once at model-build time.
        nsh = shapedirs_full.shape[-1]
        sdirs_planar = jnp.transpose(shapedirs_full, (2, 1, 0)).reshape(
            nsh, 3 * V).astype(jnp.bfloat16)                              # (20, 3V)
        pdirs_planar = jnp.transpose(
            params['posedirs'].reshape(-1, V, 3), (0, 2, 1)).reshape(
            -1, 3 * V).astype(jnp.bfloat16)                               # (486, 3V)
        vtpl_row = params['v_template'].T.reshape(1, 3 * V)               # (1, 3V) f32
        jregT = jnp.zeros((V, J_PAD), jnp.float32).at[:, :Jn].set(
            params['J_regressor'].T)                                      # (V, 64)
        weights_T = jnp.zeros((J_PAD, V), jnp.float32).at[:Jn, :].set(
            params['weights'].T)                                          # (64, V)

        # fused shape + pose blend shapes, streamed over the 3V lane axis
        v_shaped_flat, v_posed_flat = pallas_fused_blend(
            shape_components.astype(jnp.bfloat16),
            pose_feature.astype(jnp.bfloat16),
            vtpl_row, sdirs_planar, pdirs_planar, tile_n=blend_tile)
        v_posed_planar = v_posed_flat.reshape(B, 3, V)

        # lane-dense joint regression: (B*3, V) @ (V, J_PAD)
        Jp = pallas_joint_regress(v_shaped_flat.reshape(B * 3, V), jregT,
                                  tile_v=jreg_tile)
        J = jnp.transpose(Jp.reshape(B, 3, J_PAD), (0, 2, 1))[:, :Jn, :]  # (B,55,3)

        posed_joints, A = batch_rigid_transform(rot_mats, J, SMPLX_PARENTS,
                                                SMPLX_LEVELS)
        A_T = jnp.zeros((B, 16, J_PAD), jnp.float32).at[:, :, :Jn].set(
            jnp.transpose(A.reshape(B, Jn, 16), (0, 2, 1)))               # (B,16,64)

        verts_planar = pallas_skin(weights_T, A_T, v_posed_planar,
                                   tile_v=skin_tile)                      # (B,3,V)
        verts = jnp.transpose(verts_planar, (0, 2, 1))                    # (B,V,3)
    else:
        # pure-JAX f32 reference (matches the torch lbs formulation)
        blend_shape = jnp.einsum('bl,mkl->bmk', shape_components, shapedirs_full)
        v_shaped = params['v_template'][None] + blend_shape
        J = jnp.einsum('jv,bvk->bjk', params['J_regressor'], v_shaped)
        pose_offsets = (pose_feature @ params['posedirs']).reshape(B, V, 3)
        v_posed = v_shaped + pose_offsets
        posed_joints, A = batch_rigid_transform(rot_mats, J, SMPLX_PARENTS,
                                                SMPLX_LEVELS)
        T = jnp.einsum('vj,bjmn->bvmn', params['weights'], A)
        v_h = jnp.concatenate([v_posed, jnp.ones((B, V, 1), jnp.float32)], axis=-1)
        verts = jnp.einsum('bvij,bvj->bvi', T, v_h)[..., :3]

    joints = posed_joints
    joints_init = J

    # --- landmarks ---
    lmk_faces_idx = jnp.broadcast_to(params['lmk_faces_idx'][None],
                                     (B,) + params['lmk_faces_idx'].shape)
    lmk_bary = jnp.broadcast_to(params['lmk_bary_coords'][None],
                                (B,) + params['lmk_bary_coords'].shape)
    _neck_joint_loc = joints[:, 12] + trans
    # TODO(synk): find_dynamic_lmk_idx_and_bcoords_projective (dynamic contour
    # landmarks) source not provided; only static landmarks are used here.
    landmarks = vertices2landmarks(verts, params['faces'], lmk_faces_idx, lmk_bary)

    # --- vertex_joint_selector: append extra vertex joints, then landmarks ---
    extra_joints = verts[:, params['extra_joint_idx']]
    joints = jnp.concatenate([joints, extra_joints], axis=1)
    joints = jnp.concatenate([joints, landmarks], axis=1)

    Jtr = joints + trans[:, None, :]
    verts_t = verts + trans[:, None, :]

    # shift_op_j_abs(..., shifts_op=None) -> no-op
    # shift_j_abs(..., shifts=None): select kinect joints
    kjj = Jtr[:, params['kinect_smpl'][:, 1]]
    # shift_v_abs(..., kinect_smplvert is empty, shifts=None)
    kjv = verts_t[:, params['kinect_smplvert'][:, 1]]
    kj = jnp.concatenate([kjj, kjv], axis=1)
    kj = jnp.concatenate([kj, Jtr[:, params['face_smplx'][:, 1]]], axis=1)

    return dict(v=verts_t, f=params['faces'], betas=betas, Jtr=Jtr, A=A,
                J=joints_init, pose_body=pose_body, pose_hand=pose_hand_full,
                pose_jaw=pose_jaw, pose_eye=pose_eye, full_pose=full_pose,
                kjj=kjj, kjv=kjv, kj=kj, v_a=verts_t)


# ---------------------------------------------------------------------------
# Deterministic synthetic "SMPL-X" parameters
# ---------------------------------------------------------------------------
def build_params(key, V=512, Jn=NUM_JOINTS, F=64, num_betas=10, num_expr=10,
                 n_lmk=8, n_extra=10, num_hand_pca=6):
    f32 = jnp.float32
    ks = jax.random.split(key, 13)
    v_template = jax.random.normal(ks[0], (V, 3), f32) * 0.1
    shapedirs = jax.random.normal(ks[1], (V, 3, num_betas), f32) * 0.01
    exprdirs = jax.random.normal(ks[2], (V, 3, num_expr), f32) * 0.01
    posedirs = jax.random.normal(ks[3], ((Jn - 1) * 9, V * 3), f32) * 0.01
    jr = jnp.abs(jax.random.normal(ks[4], (Jn, V), f32))
    J_regressor = jr / jr.sum(axis=1, keepdims=True)
    w = jnp.abs(jax.random.normal(ks[5], (V, Jn), f32))
    weights = w / w.sum(axis=1, keepdims=True)
    faces = jax.random.randint(ks[6], (F, 3), 0, V, dtype=jnp.int32)
    lmk_faces_idx = jax.random.randint(ks[7], (n_lmk,), 0, F, dtype=jnp.int32)
    bary = jnp.abs(jax.random.normal(ks[8], (n_lmk, 3), f32)) + 0.1
    lmk_bary_coords = bary / bary.sum(axis=1, keepdims=True)
    extra_joint_idx = (jnp.arange(n_extra, dtype=jnp.int32) * 11) % V
    left_hand_mean = jax.random.normal(ks[9], (45,), f32) * 0.01
    right_hand_mean = jax.random.normal(ks[10], (45,), f32) * 0.01
    left_hand_components = jax.random.normal(ks[11], (num_hand_pca, 45), f32) * 0.01
    right_hand_components = jax.random.normal(ks[12], (num_hand_pca, 45), f32) * 0.01

    n_joints_total = Jn + n_extra + n_lmk  # 73 joints after selector + landmarks
    kinect_smpl = np.stack([np.arange(8),
                            (np.arange(8) * 7) % n_joints_total,
                            (np.arange(8) * 5) % Jn], axis=1).astype(np.int32)
    kinect_smplvert = np.zeros((0, 3), dtype=np.int32)
    face_smplx = np.stack([np.arange(5),
                           (np.arange(5) * 13) % n_joints_total],
                          axis=1).astype(np.int32)

    return dict(v_template=v_template, shapedirs=shapedirs, exprdirs=exprdirs,
                posedirs=posedirs, J_regressor=J_regressor, weights=weights,
                faces=faces, lmk_faces_idx=lmk_faces_idx,
                lmk_bary_coords=lmk_bary_coords, extra_joint_idx=extra_joint_idx,
                left_hand_mean=left_hand_mean, right_hand_mean=right_hand_mean,
                left_hand_components=left_hand_components,
                right_hand_components=right_hand_components,
                kinect_smpl=kinect_smpl, kinect_smplvert=kinect_smplvert,
                face_smplx=face_smplx, fe_scale=jnp.float32(1.0))


# ---------------------------------------------------------------------------
if __name__ == "__main__":
    key = jax.random.PRNGKey(0)
    pkey, ikey = jax.random.split(key)
    V = 512
    params = build_params(pkey, V=V)

    B = 2
    iks = jax.random.split(ikey, 8)
    root_orient = jax.random.normal(iks[0], (B, 3), jnp.float32) * 0.1
    pose_body = jax.random.normal(iks[1], (B, 63), jnp.float32) * 0.1
    pose_hand = jax.random.normal(iks[2], (B, 12), jnp.float32) * 0.1   # 2 * num_hand_pca
    pose_jaw = jax.random.normal(iks[3], (B, 3), jnp.float32) * 0.1
    pose_eye = jax.random.normal(iks[4], (B, 6), jnp.float32) * 0.1
    betas = jax.random.normal(iks[5], (B, 10), jnp.float32) * 0.5
    trans = jax.random.normal(iks[6], (B, 3), jnp.float32) * 0.1
    expression = jax.random.normal(iks[7], (B, 10), jnp.float32) * 0.1

    # Small tiles here so the multi-tile / accumulator grid paths are exercised
    # (3V = 1536 -> 3 blend tiles; V = 512 -> 4 skin tiles, 4 jreg tiles).
    res = exp_body_forward(params, root_orient, pose_body, pose_hand, pose_jaw,
                           pose_eye, betas, trans, expression, use_pallas=True,
                           blend_tile=512, skin_tile=128, jreg_tile=128)
    jax.block_until_ready(res['v'])

    # Correctness check against a pure-JAX f32 reference implementation.
    # Tolerance accounts for bf16 blend-shape weights (f32 accumulation).
    ref = exp_body_forward(params, root_orient, pose_body, pose_hand, pose_jaw,
                           pose_eye, betas, trans, expression, use_pallas=False)
    assert res['v'].shape == (B, V, 3)
    assert res['Jtr'].shape == (B, 73, 3)
    assert res['A'].shape == (B, 55, 4, 4)
    assert res['kj'].shape == (B, 8 + 0 + 5, 3)
    assert jnp.allclose(res['v'], ref['v'], rtol=2e-3, atol=2e-3), "verts mismatch"
    assert jnp.allclose(res['Jtr'], ref['Jtr'], rtol=2e-3, atol=2e-3), "joints mismatch"
    assert jnp.allclose(res['kj'], ref['kj'], rtol=2e-3, atol=2e-3), "kinect joints mismatch"
    assert jnp.allclose(res['A'], ref['A'], rtol=2e-3, atol=2e-3), "A mismatch"

    print("KERNEL_OK")
</pallas_src>

<mosaic_0001>
module attributes {stable_mosaic.version = 11 : i64} {
  func.func @_blend_kernel(%arg0: i32, %arg1: memref<2x20xbf16, #tpu.memory_space<vmem>>, %arg2: memref<2x486xbf16, #tpu.memory_space<vmem>>, %arg3: memref<1x512xf32, #tpu.memory_space<vmem>>, %arg4: memref<20x512xbf16, #tpu.memory_space<vmem>>, %arg5: memref<486x512xbf16, #tpu.memory_space<vmem>>, %arg6: memref<2x512xf32, #tpu.memory_space<vmem>>, %arg7: memref<2x512xf32, #tpu.memory_space<vmem>>) attributes {dimension_semantics = [#tpu.dimension_semantics<parallel>], iteration_bounds = array<i64: 3>, scalar_prefetch = 0 : i64, scratch_operands = 0 : i64, tpu.core_type = #tpu.core_type<tc>, window_params = [{pipeline_mode = #tpu.pipeline_mode<synchronous>, transform_indices = @transform_0, window_bounds = array<i64: 2, 20>}, {pipeline_mode = #tpu.pipeline_mode<synchronous>, transform_indices = @transform_1, window_bounds = array<i64: 2, 486>}, {transform_indices = @transform_2, window_bounds = array<i64: 1, 512>}, {transform_indices = @transform_3, window_bounds = array<i64: 20, 512>}, {transform_indices = @transform_4, window_bounds = array<i64: 486, 512>}, {transform_indices = @transform_5, window_bounds = array<i64: 2, 512>}, {transform_indices = @transform_6, window_bounds = array<i64: 2, 512>}]} {
    %c0 = arith.constant 0 : index
    %c0_0 = arith.constant 0 : index
    %0 = vector.load %arg3[%c0, %c0_0] : memref<1x512xf32, #tpu.memory_space<vmem>>, vector<1x512xf32>
    %c0_1 = arith.constant 0 : index
    %c0_2 = arith.constant 0 : index
    %1 = vector.load %arg1[%c0_1, %c0_2] : memref<2x20xbf16, #tpu.memory_space<vmem>>, vector<2x20xbf16>
    %c0_3 = arith.constant 0 : index
    %c0_4 = arith.constant 0 : index
    %2 = vector.load %arg4[%c0_3, %c0_4] : memref<20x512xbf16, #tpu.memory_space<vmem>>, vector<20x512xbf16>
    %cst = arith.constant dense<0.000000e+00> : vector<2x512xf32>
    %3 = tpu.matmul %1, %2, %cst {dimension_numbers = #tpu.dot_dimension_numbers<[1], [0], [0], [1], [0, 0, 1, 1], [], []>} : vector<2x20xbf16>, vector<20x512xbf16>, vector<2x512xf32> -> vector<2x512xf32>
    %4 = vector.broadcast %0 : vector<1x512xf32> to vector<2x512xf32>
    %5 = arith.addf %4, %3 : vector<2x512xf32>
    %c0_5 = arith.constant 0 : index
    %c0_6 = arith.constant 0 : index
    %6 = vector.load %arg6[%c0_5, %c0_6] : memref<2x512xf32, #tpu.memory_space<vmem>>, vector<2x512xf32>
    tpu.vector_store %arg6[%c0_5, %c0_6], %5 {strides = array<i32>} : memref<2x512xf32, #tpu.memory_space<vmem>>, vector<2x512xf32>,
    %c0_7 = arith.constant 0 : index
    %c0_8 = arith.constant 0 : index
    %7 = vector.load %arg2[%c0_7, %c0_8] : memref<2x486xbf16, #tpu.memory_space<vmem>>, vector<2x486xbf16>
    %c0_9 = arith.constant 0 : index
    %c0_10 = arith.constant 0 : index
    %8 = vector.load %arg5[%c0_9, %c0_10] : memref<486x512xbf16, #tpu.memory_space<vmem>>, vector<486x512xbf16>
    %cst_11 = arith.constant dense<0.000000e+00> : vector<2x512xf32>
    %9 = tpu.matmul %7, %8, %cst_11 {dimension_numbers = #tpu.dot_dimension_numbers<[1], [0], [0], [1], [0, 0, 1, 1], [], []>} : vector<2x486xbf16>, vector<486x512xbf16>, vector<2x512xf32> -> vector<2x512xf32>
    %10 = arith.addf %5, %9 : vector<2x512xf32>
    %c0_12 = arith.constant 0 : index
    %c0_13 = arith.constant 0 : index
    %11 = vector.load %arg7[%c0_12, %c0_13] : memref<2x512xf32, #tpu.memory_space<vmem>>, vector<2x512xf32>
    tpu.vector_store %arg7[%c0_12, %c0_13], %10 {strides = array<i32>} : memref<2x512xf32, #tpu.memory_space<vmem>>, vector<2x512xf32>,
    return
  }
  func.func @transform_0(%arg0: i32) -> (i32, i32) {
    %c0_i32 = arith.constant 0 : i32
    %c0_i32_0 = arith.constant 0 : i32
    %c0_i32_1 = arith.constant 0 : i32
    return %c0_i32, %c0_i32_0 : i32, i32
  }
  func.func @transform_1(%arg0: i32) -> (i32, i32) {
    %c0_i32 = arith.constant 0 : i32
    %c0_i32_0 = arith.constant 0 : i32
    %c0_i32_1 = arith.constant 0 : i32
    return %c0_i32, %c0_i32_0 : i32, i32
  }
  func.func @transform_2(%arg0: i32) -> (i32, i32) {
    %c0_i32 = arith.constant 0 : i32
    %c0_i32_0 = arith.constant 0 : i32
    return %c0_i32, %arg0 : i32, i32
  }
  func.func @transform_3(%arg0: i32) -> (i32, i32) {
    %c0_i32 = arith.constant 0 : i32
    %c0_i32_0 = arith.constant 0 : i32
    return %c0_i32, %arg0 : i32, i32
  }
  func.func @transform_4(%arg0: i32) -> (i32, i32) {
    %c0_i32 = arith.constant 0 : i32
    %c0_i32_0 = arith.constant 0 : i32
    return %c0_i32, %arg0 : i32, i32
  }
  func.func @transform_5(%arg0: i32) -> (i32, i32) {
    %c0_i32 = arith.constant 0 : i32
    %c0_i32_0 = arith.constant 0 : i32
    return %c0_i32, %arg0 : i32, i32
  }
  func.func @transform_6(%arg0: i32) -> (i32, i32) {
    %c0_i32 = arith.constant 0 : i32
    %c0_i32_0 = arith.constant 0 : i32
    return %c0_i32, %arg0 : i32, i32
  }
}

</mosaic_0001>

<llo_original>
// kernel: tpu_custom_call.1
$region0: #{tpu_custom_call.1}
  #allocation0 [shape = 'u32[]', space=smem, size = 0x4, offset = 0x4, fixed_abs, tag = 'smem constant byte address 0x4 - core index']
  #allocation1 [shape = 'u32[72,128]{1,0:T(1,128)}', space=vmem, size = 0x9000, scoped, tag = 'internal scratch']
  %s0 = inlined_call_operand.hbm [shape: bf16[2,20], index: 0, kind: input, shape index: {}]
  %s1 = inlined_call_operand.hbm [shape: bf16[2,486], index: 1, kind: input, shape index: {}]
  %s2 = inlined_call_operand.hbm [shape: f32[1,1536], index: 2, kind: input, shape index: {}]
  %s3 = inlined_call_operand.hbm [shape: bf16[20,1536], index: 3, kind: input, shape index: {}]
  %s4 = inlined_call_operand.hbm [shape: bf16[486,1536], index: 4, kind: input, shape index: {}]
  %s5 = inlined_call_operand.hbm [shape: f32[2,1536], index: 5, kind: output, shape index: {0}]
  %s6 = inlined_call_operand.hbm [shape: f32[2,1536], index: 6, kind: output, shape index: {1}]
  %7 = xla_tuple %s5, %s6
  %s8 = sld [smem:[#allocation0]]
  $region81: #{tpu_custom_call.1} parent=0
    _
  %s10 = ssub.s32 1, %s8
  %s11 = scalar_select 0, %s10, %s8
  $region1: #{tpu_custom_call.1} parent=0
    #allocation2 [shape = 'u8[512]{0}', space=vmem, size = 0x400, scoped, tag = 'input window, operand 0, single buffered']
    #allocation3 [shape = 's32[2]{0}', space=sflag, size = 0x8, scoped, tag = 'scoped memory for tpu_custom_call.1']
    #allocation4 [shape = 's32[2]{0}', space=sflag, size = 0x8, scoped, tag = 'scoped memory for tpu_custom_call.1']
    #allocation5 [shape = 'u8[2048]{0}', space=vmem, size = 0x800, scoped, tag = 'input window, operand 1, single buffered']
    #allocation6 [shape = 's32[1]{0}', space=sflag, size = 0x4, scoped, tag = 'scoped memory for tpu_custom_call.1']
    #allocation7 [shape = 'u8[4096]{0}', space=vmem, size = 0x1000, scoped, tag = 'input window, operand 2']
    #allocation8 [shape = 'u8[49152]{0}', space=vmem, size = 0xc000, scoped, tag = 'input window, operand 3']
    #allocation9 [shape = 'u8[999424]{0}', space=vmem, size = 0xf4000, scoped, tag = 'input window, operand 4']
    #allocation10 [shape = 'u8[8192]{0}', space=vmem, size = 0x2000, scoped, tag = 'output window, operand 0']
    #allocation11 [shape = 'u8[8192]{0}', space=vmem, size = 0x2000, scoped, tag = 'output window, operand 1']
    #allocation12 [shape = 's32[2]{0}', space=sflag, size = 0x8, scoped, tag = 'scoped memory for tpu_custom_call.1']
    %12 = vsyncpa [#allocation3], 0
    %13 = vsyncpa [#allocation6], 0
    %14 = vsyncpa [#allocation4], 0
    %s15 = scalar_lea.sflag [#allocation4], 1
    %16 = vsyncpa %s15, 0
    %17 = vsyncpa [#allocation12], 0
    %s18 = scalar_lea.sflag [#allocation12], 1
    %19 = vsyncpa %s18, 0
    loop: start=0, step=1, limit=5
    $region2: #{tpu_custom_call.1} parent=1 // loop_pre_header
      _
    $region3: #{tpu_custom_call.1} parent=1 // loop_header
      %s21 = sphi 0, %s25
      %p22 = scmp.ge.s32.totalorder %s21, 5
      %s29 = sphi 0, %s29
      %s31 = sphi 0, %s29
      %s32 = sphi 0, %s31
      %s46 = sphi 0, %s32
      %s50 = sphi 0, %s50
      %s52 = sphi 0, %s50
      %s53 = sphi 0, %s52
      %s67 = sphi 0, %s53
      %s73 = sphi 0, %s75
      %s76 = sphi 0, %s73
      %s77 = sphi 0, %s76
      %s93 = sphi 0, %s77
      %s99 = sphi 0, %s101
      %s102 = sphi 0, %s99
      %s103 = sphi 0, %s102
      %s119 = sphi 0, %s103
      %s125 = sphi 0, %s127
      %s128 = sphi 0, %s125
      %s129 = sphi 0, %s128
      %s145 = sphi 0, %s129
      %s151 = sphi 0, %s153
      %s154 = sphi 0, %s151
      %s155 = sphi 0, %s154
      %s171 = sphi 0, %s155
      %s177 = sphi 0, %s179
      %s180 = sphi 0, %s177
      %s181 = sphi 0, %s180
      %s197 = sphi 0, %s181
    $region4: #{tpu_custom_call.1} parent=1 // loop_header_branch
      %24 = sbr.rel (%p22) target = $region8
    $region5: #{tpu_custom_call.1} parent=1 // loop_body
      %s26 = ssub.s32 %s21, 1
      %s27 = ssub.s32 %s21, 2
      %s28 = sadd.s32 %s21, 1
      %s30 = sadd.s32 %s29, 1
      %p33 = scmp.eq.s32.totalorder %s21, 2
      %p34 = scmp.ne.s32.totalorder %s29, %s31
      %p35 = scmp.eq.s32.totalorder %s21, 0
      %p36 = por %p34, %p35
      %p37 = scmp.ne.s32.totalorder %s29, %s31
      %p38 = scmp.eq.s32.totalorder %s26, 2
      %p39 = por %p37, %p38
      %p40 = scmp.ne.s32.totalorder %s31, %s32
      %p41 = scmp.eq.s32.totalorder %s26, 0
      %p42 = por %p40, %p41
      %p43 = scmp.ne.s32.totalorder %s31, %s32
      %p44 = scmp.eq.s32.totalorder %s27, 2
      %p45 = por %p43, %p44
      %p47 = scmp.ne.s32.totalorder %s32, %s46
      %p48 = scmp.eq.s32.totalorder %s27, 0
      %p49 = por %p47, %p48
      %s51 = sadd.s32 %s50, 1
      %p54 = scmp.eq.s32.totalorder %s21, 2
      %p55 = scmp.ne.s32.totalorder %s50, %s52
      %p56 = scmp.eq.s32.totalorder %s21, 0
      %p57 = por %p55, %p56
      %p58 = scmp.ne.s32.totalorder %s50, %s52
      %p59 = scmp.eq.s32.totalorder %s26, 2
      %p60 = por %p58, %p59
      %p61 = scmp.ne.s32.totalorder %s52, %s53
      %p62 = scmp.eq.s32.totalorder %s26, 0
      %p63 = por %p61, %p62
      %p64 = scmp.ne.s32.totalorder %s52, %s53
      %p65 = scmp.eq.s32.totalorder %s27, 2
      %p66 = por %p64, %p65
      %p68 = scmp.ne.s32.totalorder %s53, %s67
      %p69 = scmp.eq.s32.totalorder %s27, 0
      %p70 = por %p68, %p69
      %s71 = ssub.s32 %s21, %s28
      %p72 = scmp.eq.s32.totalorder %s71, 0
      %s74 = sadd.s32 %s73, 1
      %s75 = scalar_select %p72, %s73, %s74
      %p78 = pneg %p72
      %p79 = scmp.eq.s32.totalorder %s21, 2
      %p80 = por %p78, %p79
      %p81 = scmp.ne.s32.totalorder %s73, %s76
      %p82 = scmp.eq.s32.totalorder %s21, 0
      %p83 = por %p81, %p82
      %p84 = scmp.ne.s32.totalorder %s73, %s76
      %p85 = scmp.eq.s32.totalorder %s26, 2
      %p86 = por %p84, %p85
      %p87 = scmp.ne.s32.totalorder %s76, %s77
      %p88 = scmp.eq.s32.totalorder %s26, 0
      %p89 = por %p87, %p88
      %p90 = scmp.ne.s32.totalorder %s76, %s77
      %p91 = scmp.eq.s32.totalorder %s27, 2
      %p92 = por %p90, %p91
      %p94 = scmp.ne.s32.totalorder %s77, %s93
      %p95 = scmp.eq.s32.totalorder %s27, 0
      %p96 = por %p94, %p95
      %s97 = ssub.s32 %s21, %s28
      %p98 = scmp.eq.s32.totalorder %s97, 0
      %s100 = sadd.s32 %s99, 1
      %s101 = scalar_select %p98, %s99, %s100
      %p104 = pneg %p98
      %p105 = scmp.eq.s32.totalorder %s21, 2
      %p106 = por %p104, %p105
      %p107 = scmp.ne.s32.totalorder %s99, %s102
      %p108 = scmp.eq.s32.totalorder %s21, 0
      %p109 = por %p107, %p108
      %p110 = scmp.ne.s32.totalorder %s99, %s102
      %p111 = scmp.eq.s32.totalorder %s26, 2
      %p112 = por %p110, %p111
      %p113 = scmp.ne.s32.totalorder %s102, %s103
      %p114 = scmp.eq.s32.totalorder %s26, 0
      %p115 = por %p113, %p114
      %p116 = scmp.ne.s32.totalorder %s102, %s103
      %p117 = scmp.eq.s32.totalorder %s27, 2
      %p118 = por %p116, %p117
      %p120 = scmp.ne.s32.totalorder %s103, %s119
      %p121 = scmp.eq.s32.totalorder %s27, 0
      %p122 = por %p120, %p121
      %s123 = ssub.s32 %s21, %s28
      %p124 = scmp.eq.s32.totalorder %s123, 0
      %s126 = sadd.s32 %s125, 1
      %s127 = scalar_select %p124, %s125, %s126
      %p130 = pneg %p124
      %p131 = scmp.eq.s32.totalorder %s21, 2
      %p132 = por %p130, %p131
      %p133 = scmp.ne.s32.totalorder %s125, %s128
      %p134 = scmp.eq.s32.totalorder %s21, 0
      %p135 = por %p133, %p134
      %p136 = scmp.ne.s32.totalorder %s125, %s128
      %p137 = scmp.eq.s32.totalorder %s26, 2
      %p138 = por %p136, %p137
      %p139 = scmp.ne.s32.totalorder %s128, %s129
      %p140 = scmp.eq.s32.totalorder %s26, 0
      %p141 = por %p139, %p140
      %p142 = scmp.ne.s32.totalorder %s128, %s129
      %p143 = scmp.eq.s32.totalorder %s27, 2
      %p144 = por %p142, %p143
      %p146 = scmp.ne.s32.totalorder %s129, %s145
      %p147 = scmp.eq.s32.totalorder %s27, 0
      %p148 = por %p146, %p147
      %s149 = ssub.s32 %s21, %s28
      %p150 = scmp.eq.s32.totalorder %s149, 0
      %s152 = sadd.s32 %s151, 1
      %s153 = scalar_select %p150, %s151, %s152
      %p156 = pneg %p150
      %p157 = scmp.eq.s32.totalorder %s21, 2
      %p158 = por %p156, %p157
      %p159 = scmp.ne.s32.totalorder %s151, %s154
      %p160 = scmp.eq.s32.totalorder %s21, 0
      %p161 = por %p159, %p160
      %p162 = scmp.ne.s32.totalorder %s151, %s154
      %p163 = scmp.eq.s32.totalorder %s26, 2
      %p164 = por %p162, %p163
      %p165 = scmp.ne.s32.totalorder %s154, %s155
      %p166 = scmp.eq.s32.totalorder %s26, 0
      %p167 = por %p165, %p166
      %p168 = scmp.ne.s32.totalorder %s154, %s155
      %p169 = scmp.eq.s32.totalorder %s27, 2
      %p170 = por %p168, %p169
      %p172 = scmp.ne.s32.totalorder %s155, %s171
      %p173 = scmp.eq.s32.totalorder %s27, 0
      %p174 = por %p172, %p173
      %s175 = ssub.s32 %s21, %s28
      %p176 = scmp.eq.s32.totalorder %s175, 0
      %s178 = sadd.s32 %s177, 1
      %s179 = scalar_select %p176, %s177, %s178
      %p182 = pneg %p176
      %p183 = scmp.eq.s32.totalorder %s21, 2
      %p184 = por %p182, %p183
      %p185 = scmp.ne.s32.totalorder %s177, %s180
      %p186 = scmp.eq.s32.totalorder %s21, 0
      %p187 = por %p185, %p186
      %p188 = scmp.ne.s32.totalorder %s177, %s180
      %p189 = scmp.eq.s32.totalorder %s26, 2
      %p190 = por %p188, %p189
      %p191 = scmp.ne.s32.totalorder %s180, %s181
      %p192 = scmp.eq.s32.totalorder %s26, 0
      %p193 = por %p191, %p192
      %p194 = scmp.ne.s32.totalorder %s180, %s181
      %p195 = scmp.eq.s32.totalorder %s27, 2
      %p196 = por %p194, %p195
      %p198 = scmp.ne.s32.totalorder %s181, %s197
      %p199 = scmp.eq.s32.totalorder %s27, 0
      %p200 = por %p198, %p199
      %p201 = scmp.le.s32.totalorder 1, %s21
      %p202 = scmp.lt.s32.totalorder %s21, 4
      %p203 = pnand %p201, %p202
      %p204 = pneg %p203
      // Predicated region
      $region9: #{tpu_custom_call.1} parent=5 // pred_check
        _
      $region10: #{tpu_custom_call.1} parent=5 // pred_check_branch
        %206 = sbr.rel (%p203) target = $region12
      $region11: #{tpu_custom_call.1} parent=5 // pred_region
        %s207 = ssub.s32 %s21, 1
        // Predicated region
        $region13: #{tpu_custom_call.1} parent=11 // pred_check
          %p208 = pneg %p42
        $region14: #{tpu_custom_call.1} parent=11 // pred_check_branch
          %210 = sbr.rel (%p208) target = $region16
        $region15: #{tpu_custom_call.1} parent=11 // pred_region
          %212 = vsyncadd [#allocation3], 0
          %s214 = sshll.u32 %s0, 4
          %s215 = int_to_ptr.hbm [resolvable:$true] %s214
          %s216 = sshll.u32 [#allocation2], 4
          %s217 = int_to_ptr.vmem [resolvable:$true] %s216
          %219 = dma.hbm_to_vmem [thread:$0]  %s215, 16, %s217, [#allocation3]
        $region16: #{tpu_custom_call.1} parent=11 // pred_fallthru
          _
        // Predicated region
        $region17: #{tpu_custom_call.1} parent=11 // pred_check
          %p220 = pneg %p63
        $region18: #{tpu_custom_call.1} parent=11 // pred_check_branch
          %222 = sbr.rel (%p220) target = $region20
        $region19: #{tpu_custom_call.1} parent=11 // pred_region
          %224 = vsyncadd [#allocation6], 0
          %s226 = sshll.u32 %s1, 4
          %s227 = int_to_ptr.hbm [resolvable:$true] %s226
          %s228 = sshll.u32 [#allocation5], 4
          %s229 = int_to_ptr.vmem [resolvable:$true] %s228
          %231 = dma.hbm_to_vmem [thread:$0]  %s227, 64, %s229, [#allocation6]
        $region20: #{tpu_custom_call.1} parent=11 // pred_fallthru
          _
      $region12: #{tpu_custom_call.1} parent=5 // pred_fallthru
        _
      %p232 = scmp.lt.s32.totalorder %s21, 3
      // Predicated region
      $region21: #{tpu_custom_call.1} parent=5 // pred_check
        %p233 = pneg %p232
      $region22: #{tpu_custom_call.1} parent=5 // pred_check_branch
        %235 = sbr.rel (%p233) target = $region24
      $region23: #{tpu_custom_call.1} parent=5 // pred_region
        // Predicated region
        $region25: #{tpu_custom_call.1} parent=23 // pred_check
          %p236 = pneg %p83
        $region26: #{tpu_custom_call.1} parent=23 // pred_check_branch
          %238 = sbr.rel (%p236) target = $region28
        $region27: #{tpu_custom_call.1} parent=23 // pred_region
          %s239 = sand.u32 %s21, 1
          %s240 = scalar_lea.sflag [#allocation3], %s239
          %s241 = sand.u32 %s73, 1
          %s242 = smul.addr %s241, 4
          %s243 = scalar_lea.vmem [#allocation7], %s242
          %s244 = smul.u32 4, %s21
          %246 = vsyncadd %s240, 0
          %s247 = scalar_lea.hbm %s2, %s244
          %s249 = sshll.u32 %s247, 4
          %s250 = int_to_ptr.hbm [resolvable:$true] %s249
          %s251 = sshll.u32 %s243, 4
          %s252 = int_to_ptr.vmem [resolvable:$true] %s251
          %254 = dma.hbm_to_vmem [thread:$0]  %s250, 64, %s252, %s240
        $region28: #{tpu_custom_call.1} parent=23 // pred_fallthru
          _
        // Predicated region
        $region29: #{tpu_custom_call.1} parent=23 // pred_check
          %p255 = pneg %p109
        $region30: #{tpu_custom_call.1} parent=23 // pred_check_branch
          %257 = sbr.rel (%p255) target = $region32
        $region31: #{tpu_custom_call.1} parent=23 // pred_region
          %s258 = sand.u32 %s21, 1
          %s259 = scalar_lea.sflag [#allocation3], %s258
          %s260 = sand.u32 %s99, 1
          %s261 = smul.addr %s260, 48
          %s262 = scalar_lea.vmem [#allocation8], %s261
          %s263 = smul.u32 4, %s21
          %265 = vsyncadd %s259, 0
          %s266 = smul.addr %s263, 4
          %s267 = scalar_lea.hbm %s3, %s266
          %s268 = sshll.u32 %s267, 4
          %s269 = int_to_ptr.hbm [resolvable:$true] %s268
          %s270 = sshll.u32 %s262, 4
          %s271 = int_to_ptr.vmem [resolvable:$true] %s270
          %276 = dma.hbm_to_vmem [thread:$0]  %s269, 768, %s271, %s259, 768, 256, 16
        $region32: #{tpu_custom_call.1} parent=23 // pred_fallthru
          _
        // Predicated region
        $region33: #{tpu_custom_call.1} parent=23 // pred_check
          %p277 = pneg %p135
        $region34: #{tpu_custom_call.1} parent=23 // pred_check_branch
          %279 = sbr.rel (%p277) target = $region36
        $region35: #{tpu_custom_call.1} parent=23 // pred_region
          %s280 = sand.u32 %s21, 1
          %s281 = scalar_lea.sflag [#allocation3], %s280
          %s282 = sand.u32 %s125, 1
          %s283 = smul.addr %s282, 976
          %s284 = scalar_lea.vmem [#allocation9], %s283
          %s285 = smul.u32 4, %s21
          %287 = vsyncadd %s281, 0
          %s288 = smul.addr %s285, 4
          %s289 = scalar_lea.hbm %s4, %s288
          %s290 = sshll.u32 %s289, 4
          %s291 = int_to_ptr.hbm [resolvable:$true] %s290
          %s292 = sshll.u32 %s284, 4
          %s293 = int_to_ptr.vmem [resolvable:$true] %s292
          %298 = dma.hbm_to_vmem [thread:$0]  %s291, 15616, %s293, %s281, 768, 256, 16
        $region36: #{tpu_custom_call.1} parent=23 // pred_fallthru
          _
      $region24: #{tpu_custom_call.1} parent=5 // pred_fallthru
        _
      %p299 = scmp.le.s32.totalorder 1, %s21
      %p300 = scmp.lt.s32.totalorder %s21, 4
      %p301 = pnand %p299, %p300
      %p302 = pneg %p301
      // Predicated region
      $region37: #{tpu_custom_call.1} parent=5 // pred_check
        _
      $region38: #{tpu_custom_call.1} parent=5 // pred_check_branch
        %304 = sbr.rel (%p301) target = $region40
      $region39: #{tpu_custom_call.1} parent=5 // pred_region
        %s305 = ssub.s32 %s21, 1
        // Predicated region
        $region41: #{tpu_custom_call.1} parent=39 // pred_check
          %p306 = pneg %p42
        $region42: #{tpu_custom_call.1} parent=39 // pred_check_branch
          %308 = sbr.rel (%p306) target = $region44
        $region43: #{tpu_custom_call.1} parent=39 // pred_region
          %310 = dma.done [#allocation3], 16
        $region44: #{tpu_custom_call.1} parent=39 // pred_fallthru
          _
        // Predicated region
        $region45: #{tpu_custom_call.1} parent=39 // pred_check
          %p311 = pneg %p63
        $region46: #{tpu_custom_call.1} parent=39 // pred_check_branch
          %313 = sbr.rel (%p311) target = $region48
        $region47: #{tpu_custom_call.1} parent=39 // pred_region
          %315 = dma.done [#allocation6], 64
        $region48: #{tpu_custom_call.1} parent=39 // pred_fallthru
          _
        %s316 = sand.u32 %s26, 1
        %s317 = scalar_lea.sflag [#allocation3], %s316
        %s318 = sand.u32 %s76, 1
        %s319 = smul.addr %s318, 4
        %s320 = scalar_lea.vmem [#allocation7], %s319
        // Predicated region
        $region49: #{tpu_custom_call.1} parent=39 // pred_check
          %p321 = pneg %p89
        $region50: #{tpu_custom_call.1} parent=39 // pred_check_branch
          %323 = sbr.rel (%p321) target = $region52
        $region51: #{tpu_custom_call.1} parent=39 // pred_region
          %325 = dma.done %s317, 64
        $region52: #{tpu_custom_call.1} parent=39 // pred_fallthru
          _
        %s326 = sand.u32 %s26, 1
        %s327 = scalar_lea.sflag [#allocation3], %s326
        %s328 = sand.u32 %s102, 1
        %s329 = smul.addr %s328, 48
        %s330 = scalar_lea.vmem [#allocation8], %s329
        // Predicated region
        $region53: #{tpu_custom_call.1} parent=39 // pred_check
          %p331 = pneg %p115
        $region54: #{tpu_custom_call.1} parent=39 // pred_check_branch
          %333 = sbr.rel (%p331) target = $region56
        $region55: #{tpu_custom_call.1} parent=39 // pred_region
          %335 = dma.done %s327, 768
        $region56: #{tpu_custom_call.1} parent=39 // pred_fallthru
          _
        %s336 = sand.u32 %s26, 1
        %s337 = scalar_lea.sflag [#allocation3], %s336
        %s338 = sand.u32 %s128, 1
        %s339 = smul.addr %s338, 976
        %s340 = scalar_lea.vmem [#allocation9], %s339
        // Predicated region
        $region57: #{tpu_custom_call.1} parent=39 // pred_check
          %p341 = pneg %p141
        $region58: #{tpu_custom_call.1} parent=39 // pred_check_branch
          %343 = sbr.rel (%p341) target = $region60
        $region59: #{tpu_custom_call.1} parent=39 // pred_region
          %345 = dma.done %s337, 15616
        $region60: #{tpu_custom_call.1} parent=39 // pred_fallthru
          _
        %p346 = pneg %p42
        %p347 = pneg %p39
        %p348 = pneg %p63
        %p349 = pneg %p60
        %s350 = sand.u32 %s26, 1
        %s351 = scalar_lea.sflag [#allocation3], %s350
        %s352 = sand.u32 %s76, 1
        %s353 = smul.addr %s352, 4
        %s354 = scalar_lea.vmem [#allocation7], %s353
        %p355 = pneg %p89
        %p356 = pneg %p86
        %s357 = sand.u32 %s26, 1
        %s358 = scalar_lea.sflag [#allocation3], %s357
        %s359 = sand.u32 %s102, 1
        %s360 = smul.addr %s359, 48
        %s361 = scalar_lea.vmem [#allocation8], %s360
        %p362 = pneg %p115
        %p363 = pneg %p112
        %s364 = sand.u32 %s26, 1
        %s365 = scalar_lea.sflag [#allocation3], %s364
        %s366 = sand.u32 %s128, 1
        %s367 = smul.addr %s366, 976
        %s368 = scalar_lea.vmem [#allocation9], %s367
        %p369 = pneg %p141
        %p370 = pneg %p138
        %p371 = pneg %p167
        %p372 = pneg %p164
        %s373 = sand.u32 %s154, 1
        %s374 = scalar_lea.sflag [#allocation4], %s373
        %s375 = sand.u32 %s154, 1
        %s376 = smul.addr %s375, 8
        %s377 = scalar_lea.vmem [#allocation10], %s376
        %p378 = pneg %p193
        %p379 = pneg %p190
        %s380 = sand.u32 %s180, 1
        %s381 = scalar_lea.sflag [#allocation12], %s380
        %s382 = sand.u32 %s180, 1
        %s383 = smul.addr %s382, 8
        %s384 = scalar_lea.vmem [#allocation11], %s383
        %s385 = smul.u32 4, %s26
        %s386 = smul.u32 4, %s26
        %s387 = smul.u32 4, %s26
        %s388 = smul.u32 4, %s26
        %s389 = smul.u32 4, %s26
        %v391 = vld [vmem:[%s320] sm:$0xf]
        %v392 = vld [vmem:[#allocation2] sm:$0x1]
        %v393 = vld [vmem:[%s330] sm:$0xff]
        %v394 = vld [vmem:[%s330 + $0x8] sm:$0xff]
        %v395 = vld [vmem:[%s330 + $0x10] sm:$0xff]
        %v396 = vld [vmem:[%s330 + $0x18] sm:$0xff]
        %v397 = vld [vmem:[%s330 + $0x20] sm:$0x33]
        %v398 = vld [vmem:[%s330 + $0x28] sm:$0x33]
        %v405 = vunpack.c.l.b16 %v393
        %v406 = vunpack.c.h.b16 %v393
        %v407 = vunpack.c.l.b16 %v394
        %v408 = vunpack.c.h.b16 %v394
        %v409 = vunpack.c.l.b16 %v395
        %v410 = vunpack.c.h.b16 %v395
        %v411 = vunpack.c.l.b16 %v396
        %v412 = vunpack.c.h.b16 %v396
        %v413 = vunpack.c.l.b16 %v397
        %v414 = vunpack.c.h.b16 %v397
        %v415 = vunpack.c.l.b16 %v398
        %v416 = vunpack.c.h.b16 %v398
        %v417 = vpack.c.b16 %v409, %v405
        %v418 = vpack.c.b16 %v410, %v406
        %v419 = vpack.c.b16 %v411, %v407
        %v420 = vpack.c.b16 %v412, %v408
        %v421 = vpack.c.b16 %v413, %v413
        %v422 = vpack.c.b16 %v414, %v414
        %v423 = vpack.c.b16 %v415, %v415
        %v424 = vpack.c.b16 %v416, %v416
        %vm429 = vcmask 162816
        %v431 = vsel %vm429, %v392, 0
        %vm433 = vcmask 1041408
        %v435 = vsel %vm433, %v421, 0
        %v438 = vsel %vm433, %v422, 0
        %v441 = vsel %vm433, %v423, 0
        %v444 = vsel %vm433, %v424, 0
        %446 = vmatpush.bf16.msra.mxu0 0
        %447 = vmatpush.bf16.msra.mxu0 0
        %448 = vmatpush.bf16.msra.mxu0 0
        %449 = vmatpush.bf16.msra.mxu0 0
        %450 = vmatpush.bf16.msra.mxu0 0
        %451 = vmatpush.bf16.msra.mxu0 0
        %452 = vmatpush.bf16.msra.mxu0 %v435
        %453 = vmatpush.bf16.msra.mxu0 %v417
        %454 = vmatmul.bf16.gmra.mxu0 %v431
        %v455 = vpop.f32.mrf.mxu0
        %v456 = vadd.f32 0.0, %v455
        %v457 = vpop.f32.mrf.mxu0
        %458 = vdwg.mxu0
        %459 = vmatpush.bf16.msra.mxu0 0
        %460 = vmatpush.bf16.msra.mxu0 0
        %461 = vmatpush.bf16.msra.mxu0 0
        %462 = vmatpush.bf16.msra.mxu0 0
        %463 = vmatpush.bf16.msra.mxu0 0
        %464 = vmatpush.bf16.msra.mxu0 0
        %465 = vmatpush.bf16.msra.mxu0 %v438
        %466 = vmatpush.bf16.msra.mxu0 %v418
        %467 = vmatmul.bf16.gmra.mxu0 %v431
        %v468 = vpop.f32.mrf.mxu0
        %v469 = vadd.f32 0.0, %v468
        %v470 = vpop.f32.mrf.mxu0
        %471 = vdwg.mxu0
        %472 = vmatpush.bf16.msra.mxu0 0
        %473 = vmatpush.bf16.msra.mxu0 0
        %474 = vmatpush.bf16.msra.mxu0 0
        %475 = vmatpush.bf16.msra.mxu0 0
        %476 = vmatpush.bf16.msra.mxu0 0
        %477 = vmatpush.bf16.msra.mxu0 0
        %478 = vmatpush.bf16.msra.mxu0 %v441
        %479 = vmatpush.bf16.msra.mxu0 %v419
        %480 = vmatmul.bf16.gmra.mxu0 %v431
        %v481 = vpop.f32.mrf.mxu0
        %v482 = vadd.f32 0.0, %v481
        %v483 = vpop.f32.mrf.mxu0
        %484 = vdwg.mxu0
        %485 = vmatpush.bf16.msra.mxu0 0
        %486 = vmatpush.bf16.msra.mxu0 0
        %487 = vmatpush.bf16.msra.mxu0 0
        %488 = vmatpush.bf16.msra.mxu0 0
        %489 = vmatpush.bf16.msra.mxu0 0
        %490 = vmatpush.bf16.msra.mxu0 0
        %491 = vmatpush.bf16.msra.mxu0 %v444
        %492 = vmatpush.bf16.msra.mxu0 %v420
        %493 = vmatmul.bf16.gmra.mxu0 %v431
        %v494 = vpop.f32.mrf.mxu0
        %v495 = vadd.f32 0.0, %v494
        %v496 = vpop.f32.mrf.mxu0
        %497 = vdwg.mxu0
        %v499 = vperm.slane %v391, 0
        %v500 = vperm.slane %v391, 1
        %v501 = vperm.slane %v391, 2
        %v502 = vperm.slane %v391, 3
        %v507 = vadd.f32 %v499, %v456
        %v508 = vadd.f32 %v500, %v469
        %v509 = vadd.f32 %v501, %v482
        %v510 = vadd.f32 %v502, %v495
        %v515 = vrot.slane %v508, 6
        %v516 = vrot.slane %v509, 4
        %v517 = vrot.slane %v510, 2
        %v518 = vsel %vm433, %v507, %v515
        %vm519 = vcmask 1045508
        %v520 = vsel %vm519, %v516, %v517
        %vm521 = vcmask 1043456
        %v522 = vsel %vm521, %v518, %v520
        %524 = vst [vmem:[%s377] sm:$0xff] %v522
        %v525 = vld [vmem:[#allocation5] sm:$0xf]
        %v526 = vld [vmem:[%s340] sm:$0xff]
        %v527 = vld [vmem:[%s340 + $0x8] sm:$0xff]
        %v528 = vld [vmem:[%s340 + $0x10] sm:$0xff]
        %v529 = vld [vmem:[%s340 + $0x18] sm:$0xff]
        %v530 = vld [vmem:[%s340 + $0x20] sm:$0xff]
        %v531 = vld [vmem:[%s340 + $0x28] sm:$0xff]
        %v532 = vld [vmem:[%s340 + $0x30] sm:$0xff]
        %v533 = vld [vmem:[%s340 + $0x38] sm:$0xff]
        %v534 = vld [vmem:[%s340 + $0x40] sm:$0xff]
        %v535 = vld [vmem:[%s340 + $0x48] sm:$0xff]
        %v536 = vld [vmem:[%s340 + $0x50] sm:$0xff]
        %v537 = vld [vmem:[%s340 + $0x58] sm:$0xff]
        %v538 = vld [vmem:[%s340 + $0x60] sm:$0xff]
        %v539 = vld [vmem:[%s340 + $0x68] sm:$0xff]
        %v540 = vld [vmem:[%s340 + $0x70] sm:$0xff]
        %v541 = vld [vmem:[%s340 + $0x78] sm:$0xff]
        %v542 = vld [vmem:[%s340 + $0x80] sm:$0xff]
        %v543 = vld [vmem:[%s340 + $0x88] sm:$0xff]
        %v544 = vld [vmem:[%s340 + $0x90] sm:$0xff]
        %v545 = vld [vmem:[%s340 + $0x98] sm:$0xff]
        %v546 = vld [vmem:[%s340 + $0xa0] sm:$0xff]
        %v547 = vld [vmem:[%s340 + $0xa8] sm:$0xff]
        %v548 = vld [vmem:[%s340 + $0xb0] sm:$0xff]
        %v549 = vld [vmem:[%s340 + $0xb8] sm:$0xff]
        %v550 = vld [vmem:[%s340 + $0xc0] sm:$0xff]
        %v551 = vld [vmem:[%s340 + $0xc8] sm:$0xff]
        %v552 = vld [vmem:[%s340 + $0xd0] sm:$0xff]
        %v553 = vld [vmem:[%s340 + $0xd8] sm:$0xff]
        %v554 = vld [vmem:[%s340 + $0xe0] sm:$0xff]
        %v555 = vld [vmem:[%s340 + $0xe8] sm:$0xff]
        %v556 = vld [vmem:[%s340 + $0xf0] sm:$0xff]
        %v557 = vld [vmem:[%s340 + $0xf8] sm:$0xff]
        %v558 = vld [vmem:[%s340 + $0x100] sm:$0xff]
        %v559 = vld [vmem:[%s340 + $0x108] sm:$0xff]
        %v560 = vld [vmem:[%s340 + $0x110] sm:$0xff]
        %v561 = vld [vmem:[%s340 + $0x118] sm:$0xff]
        %v562 = vld [vmem:[%s340 + $0x120] sm:$0xff]
        %v563 = vld [vmem:[%s340 + $0x128] sm:$0xff]
        %v564 = vld [vmem:[%s340 + $0x130] sm:$0xff]
        %v565 = vld [vmem:[%s340 + $0x138] sm:$0xff]
        %v566 = vld [vmem:[%s340 + $0x140] sm:$0xff]
        %v567 = vld [vmem:[%s340 + $0x148] sm:$0xff]
        %v568 = vld [vmem:[%s340 + $0x150] sm:$0xff]
        %v569 = vld [vmem:[%s340 + $0x158] sm:$0xff]
        %v570 = vld [vmem:[%s340 + $0x160] sm:$0xff]
        %v571 = vld [vmem:[%s340 + $0x168] sm:$0xff]
        %v572 = vld [vmem:[%s340 + $0x170] sm:$0xff]
        %v573 = vld [vmem:[%s340 + $0x178] sm:$0xff]
        %v574 = vld [vmem:[%s340 + $0x180] sm:$0xff]
        %v575 = vld [vmem:[%s340 + $0x188] sm:$0xff]
        %v576 = vld [vmem:[%s340 + $0x190] sm:$0xff]
        %v577 = vld [vmem:[%s340 + $0x198] sm:$0xff]
        %v578 = vld [vmem:[%s340 + $0x1a0] sm:$0xff]
        %v579 = vld [vmem:[%s340 + $0x1a8] sm:$0xff]
        %v580 = vld [vmem:[%s340 + $0x1b0] sm:$0xff]
        %v581 = vld [vmem:[%s340 + $0x1b8] sm:$0xff]
        %v582 = vld [vmem:[%s340 + $0x1c0] sm:$0xff]
        %v583 = vld [vmem:[%s340 + $0x1c8] sm:$0xff]
        %v584 = vld [vmem:[%s340 + $0x1d0] sm:$0xff]
        %v585 = vld [vmem:[%s340 + $0x1d8] sm:$0xff]
        %v586 = vld [vmem:[%s340 + $0x1e0] sm:$0xff]
        %v587 = vld [vmem:[%s340 + $0x1e8] sm:$0xff]
        %v588 = vld [vmem:[%s340 + $0x1f0] sm:$0xff]
        %v589 = vld [vmem:[%s340 + $0x1f8] sm:$0xff]
        %v590 = vld [vmem:[%s340 + $0x200] sm:$0xff]
        %v591 = vld [vmem:[%s340 + $0x208] sm:$0xff]
        %v592 = vld [vmem:[%s340 + $0x210] sm:$0xff]
        %v593 = vld [vmem:[%s340 + $0x218] sm:$0xff]
        %v594 = vld [vmem:[%s340 + $0x220] sm:$0xff]
        %v595 = vld [vmem:[%s340 + $0x228] sm:$0xff]
        %v596 = vld [vmem:[%s340 + $0x230] sm:$0xff]
        %v597 = vld [vmem:[%s340 + $0x238] sm:$0xff]
        %v598 = vld [vmem:[%s340 + $0x240] sm:$0xff]
        %v599 = vld [vmem:[%s340 + $0x248] sm:$0xff]
        %v600 = vld [vmem:[%s340 + $0x250] sm:$0xff]
        %v601 = vld [vmem:[%s340 + $0x258] sm:$0xff]
        %v602 = vld [vmem:[%s340 + $0x260] sm:$0xff]
        %v603 = vld [vmem:[%s340 + $0x268] sm:$0xff]
        %v604 = vld [vmem:[%s340 + $0x270] sm:$0xff]
        %v605 = vld [vmem:[%s340 + $0x278] sm:$0xff]
        %v606 = vld [vmem:[%s340 + $0x280] sm:$0xff]
        %v607 = vld [vmem:[%s340 + $0x288] sm:$0xff]
        %v608 = vld [vmem:[%s340 + $0x290] sm:$0xff]
        %v609 = vld [vmem:[%s340 + $0x298] sm:$0xff]
        %v610 = vld [vmem:[%s340 + $0x2a0] sm:$0xff]
        %v611 = vld [vmem:[%s340 + $0x2a8] sm:$0xff]
        %v612 = vld [vmem:[%s340 + $0x2b0] sm:$0xff]
        %v613 = vld [vmem:[%s340 + $0x2b8] sm:$0xff]
        %v614 = vld [vmem:[%s340 + $0x2c0] sm:$0xff]
        %v615 = vld [vmem:[%s340 + $0x2c8] sm:$0xff]
        %v616 = vld [vmem:[%s340 + $0x2d0] sm:$0xff]
        %v617 = vld [vmem:[%s340 + $0x2d8] sm:$0xff]
        %v618 = vld [vmem:[%s340 + $0x2e0] sm:$0xff]
        %v619 = vld [vmem:[%s340 + $0x2e8] sm:$0xff]
        %v620 = vld [vmem:[%s340 + $0x2f0] sm:$0xff]
        %v621 = vld [vmem:[%s340 + $0x2f8] sm:$0xff]
        %v622 = vld [vmem:[%s340 + $0x300] sm:$0xff]
        %v623 = vld [vmem:[%s340 + $0x308] sm:$0xff]
        %v624 = vld [vmem:[%s340 + $0x310] sm:$0xff]
        %v625 = vld [vmem:[%s340 + $0x318] sm:$0xff]
        %v626 = vld [vmem:[%s340 + $0x320] sm:$0xff]
        %v627 = vld [vmem:[%s340 + $0x328] sm:$0xff]
        %v628 = vld [vmem:[%s340 + $0x330] sm:$0xff]
        %v629 = vld [vmem:[%s340 + $0x338] sm:$0xff]
        %v630 = vld [vmem:[%s340 + $0x340] sm:$0xff]
        %v631 = vld [vmem:[%s340 + $0x348] sm:$0xff]
        %v632 = vld [vmem:[%s340 + $0x350] sm:$0xff]
        %v633 = vld [vmem:[%s340 + $0x358] sm:$0xff]
        %v634 = vld [vmem:[%s340 + $0x360] sm:$0xff]
        %v635 = vld [vmem:[%s340 + $0x368] sm:$0xff]
        %v636 = vld [vmem:[%s340 + $0x370] sm:$0xff]
        %v637 = vld [vmem:[%s340 + $0x378] sm:$0xff]
        %v638 = vld [vmem:[%s340 + $0x380] sm:$0xff]
        %v639 = vld [vmem:[%s340 + $0x388] sm:$0xff]
        %v640 = vld [vmem:[%s340 + $0x390] sm:$0xff]
        %v641 = vld [vmem:[%s340 + $0x398] sm:$0xff]
        %v642 = vld [vmem:[%s340 + $0x3a0] sm:$0xff]
        %v643 = vld [vmem:[%s340 + $0x3a8] sm:$0xff]
        %v644 = vld [vmem:[%s340 + $0x3b0] sm:$0xff]
        %v645 = vld [vmem:[%s340 + $0x3b8] sm:$0xff]
        %v646 = vld [vmem:[%s340 + $0x3c0] sm:$0x77]
        %v647 = vld [vmem:[%s340 + $0x3c8] sm:$0x77]
        %649 = vst [vmem:[#allocation1] ss:$9 sm:$0xff] %v525
        %v650 = vld [vmem:[#allocation1] sm:$0xff]
        %v651 = vld [vmem:[#allocation1 + $0x9] sm:$0xff]
        %v652 = vld [vmem:[#allocation1 + $0x12] sm:$0xff]
        %v653 = vld [vmem:[#allocation1 + $0x1b] sm:$0xff]
        %v779 = vunpack.c.l.b16 %v526
        %v780 = vunpack.c.h.b16 %v526
        %v781 = vunpack.c.l.b16 %v527
        %v782 = vunpack.c.h.b16 %v527
        %v783 = vunpack.c.l.b16 %v528
        %v784 = vunpack.c.h.b16 %v528
        %v785 = vunpack.c.l.b16 %v529
        %v786 = vunpack.c.h.b16 %v529
        %v787 = vunpack.c.l.b16 %v530
        %v788 = vunpack.c.h.b16 %v530
        %v789 = vunpack.c.l.b16 %v531
        %v790 = vunpack.c.h.b16 %v531
        %v791 = vunpack.c.l.b16 %v532
        %v792 = vunpack.c.h.b16 %v532
        %v793 = vunpack.c.l.b16 %v533
        %v794 = vunpack.c.h.b16 %v533
        %v795 = vunpack.c.l.b16 %v534
        %v796 = vunpack.c.h.b16 %v534
        %v797 = vunpack.c.l.b16 %v535
        %v798 = vunpack.c.h.b16 %v535
        %v799 = vunpack.c.l.b16 %v536
        %v800 = vunpack.c.h.b16 %v536
        %v801 = vunpack.c.l.b16 %v537
        %v802 = vunpack.c.h.b16 %v537
        %v803 = vunpack.c.l.b16 %v538
        %v804 = vunpack.c.h.b16 %v538
        %v805 = vunpack.c.l.b16 %v539
        %v806 = vunpack.c.h.b16 %v539
        %v807 = vunpack.c.l.b16 %v540
        %v808 = vunpack.c.h.b16 %v540
        %v809 = vunpack.c.l.b16 %v541
        %v810 = vunpack.c.h.b16 %v541
        %v811 = vunpack.c.l.b16 %v542
        %v812 = vunpack.c.h.b16 %v542
        %v813 = vunpack.c.l.b16 %v543
        %v814 = vunpack.c.h.b16 %v543
        %v815 = vunpack.c.l.b16 %v544
        %v816 = vunpack.c.h.b16 %v544
        %v817 = vunpack.c.l.b16 %v545
        %v818 = vunpack.c.h.b16 %v545
        %v819 = vunpack.c.l.b16 %v546
        %v820 = vunpack.c.h.b16 %v546
        %v821 = vunpack.c.l.b16 %v547
        %v822 = vunpack.c.h.b16 %v547
        %v823 = vunpack.c.l.b16 %v548
        %v824 = vunpack.c.h.b16 %v548
        %v825 = vunpack.c.l.b16 %v549
        %v826 = vunpack.c.h.b16 %v549
        %v827 = vunpack.c.l.b16 %v550
        %v828 = vunpack.c.h.b16 %v550
        %v829 = vunpack.c.l.b16 %v551
        %v830 = vunpack.c.h.b16 %v551
        %v831 = vunpack.c.l.b16 %v552
        %v832 = vunpack.c.h.b16 %v552
        %v833 = vunpack.c.l.b16 %v553
        %v834 = vunpack.c.h.b16 %v553
        %v835 = vunpack.c.l.b16 %v554
        %v836 = vunpack.c.h.b16 %v554
        %v837 = vunpack.c.l.b16 %v555
        %v838 = vunpack.c.h.b16 %v555
        %v839 = vunpack.c.l.b16 %v556
        %v840 = vunpack.c.h.b16 %v556
        %v841 = vunpack.c.l.b16 %v557
        %v842 = vunpack.c.h.b16 %v557
        %v843 = vunpack.c.l.b16 %v558
        %v844 = vunpack.c.h.b16 %v558
        %v845 = vunpack.c.l.b16 %v559
        %v846 = vunpack.c.h.b16 %v559
        %v847 = vunpack.c.l.b16 %v560
        %v848 = vunpack.c.h.b16 %v560
        %v849 = vunpack.c.l.b16 %v561
        %v850 = vunpack.c.h.b16 %v561
        %v851 = vunpack.c.l.b16 %v562
        %v852 = vunpack.c.h.b16 %v562
        %v853 = vunpack.c.l.b16 %v563
        %v854 = vunpack.c.h.b16 %v563
        %v855 = vunpack.c.l.b16 %v564
        %v856 = vunpack.c.h.b16 %v564
        %v857 = vunpack.c.l.b16 %v565
        %v858 = vunpack.c.h.b16 %v565
        %v859 = vunpack.c.l.b16 %v566
        %v860 = vunpack.c.h.b16 %v566
        %v861 = vunpack.c.l.b16 %v567
        %v862 = vunpack.c.h.b16 %v567
        %v863 = vunpack.c.l.b16 %v568
        %v864 = vunpack.c.h.b16 %v568
        %v865 = vunpack.c.l.b16 %v569
        %v866 = vunpack.c.h.b16 %v569
        %v867 = vunpack.c.l.b16 %v570
        %v868 = vunpack.c.h.b16 %v570
        %v869 = vunpack.c.l.b16 %v571
        %v870 = vunpack.c.h.b16 %v571
        %v871 = vunpack.c.l.b16 %v572
        %v872 = vunpack.c.h.b16 %v572
        %v873 = vunpack.c.l.b16 %v573
        %v874 = vunpack.c.h.b16 %v573
        %v875 = vunpack.c.l.b16 %v574
        %v876 = vunpack.c.h.b16 %v574
        %v877 = vunpack.c.l.b16 %v575
        %v878 = vunpack.c.h.b16 %v575
        %v879 = vunpack.c.l.b16 %v576
        %v880 = vunpack.c.h.b16 %v576
        %v881 = vunpack.c.l.b16 %v577
        %v882 = vunpack.c.h.b16 %v577
        %v883 = vunpack.c.l.b16 %v578
        %v884 = vunpack.c.h.b16 %v578
        %v885 = vunpack.c.l.b16 %v579
        %v886 = vunpack.c.h.b16 %v579
        %v887 = vunpack.c.l.b16 %v580
        %v888 = vunpack.c.h.b16 %v580
        %v889 = vunpack.c.l.b16 %v581
        %v890 = vunpack.c.h.b16 %v581
        %v891 = vunpack.c.l.b16 %v582
        %v892 = vunpack.c.h.b16 %v582
        %v893 = vunpack.c.l.b16 %v583
        %v894 = vunpack.c.h.b16 %v583
        %v895 = vunpack.c.l.b16 %v584
        %v896 = vunpack.c.h.b16 %v584
        %v897 = vunpack.c.l.b16 %v585
        %v898 = vunpack.c.h.b16 %v585
        %v899 = vunpack.c.l.b16 %v586
        %v900 = vunpack.c.h.b16 %v586
        %v901 = vunpack.c.l.b16 %v587
        %v902 = vunpack.c.h.b16 %v587
        %v903 = vunpack.c.l.b16 %v588
        %v904 = vunpack.c.h.b16 %v588
        %v905 = vunpack.c.l.b16 %v589
        %v906 = vunpack.c.h.b16 %v589
        %v907 = vunpack.c.l.b16 %v590
        %v908 = vunpack.c.h.b16 %v590
        %v909 = vunpack.c.l.b16 %v591
        %v910 = vunpack.c.h.b16 %v591
        %v911 = vunpack.c.l.b16 %v592
        %v912 = vunpack.c.h.b16 %v592
        %v913 = vunpack.c.l.b16 %v593
        %v914 = vunpack.c.h.b16 %v593
        %v915 = vunpack.c.l.b16 %v594
        %v916 = vunpack.c.h.b16 %v594
        %v917 = vunpack.c.l.b16 %v595
        %v918 = vunpack.c.h.b16 %v595
        %v919 = vunpack.c.l.b16 %v596
        %v920 = vunpack.c.h.b16 %v596
        %v921 = vunpack.c.l.b16 %v597
        %v922 = vunpack.c.h.b16 %v597
        %v923 = vunpack.c.l.b16 %v598
        %v924 = vunpack.c.h.b16 %v598
        %v925 = vunpack.c.l.b16 %v599
        %v926 = vunpack.c.h.b16 %v599
        %v927 = vunpack.c.l.b16 %v600
        %v928 = vunpack.c.h.b16 %v600
        %v929 = vunpack.c.l.b16 %v601
        %v930 = vunpack.c.h.b16 %v601
        %v931 = vunpack.c.l.b16 %v602
        %v932 = vunpack.c.h.b16 %v602
        %v933 = vunpack.c.l.b16 %v603
        %v934 = vunpack.c.h.b16 %v603
        %v935 = vunpack.c.l.b16 %v604
        %v936 = vunpack.c.h.b16 %v604
        %v937 = vunpack.c.l.b16 %v605
        %v938 = vunpack.c.h.b16 %v605
        %v939 = vunpack.c.l.b16 %v606
        %v940 = vunpack.c.h.b16 %v606
        %v941 = vunpack.c.l.b16 %v607
        %v942 = vunpack.c.h.b16 %v607
        %v943 = vunpack.c.l.b16 %v608
        %v944 = vunpack.c.h.b16 %v608
        %v945 = vunpack.c.l.b16 %v609
        %v946 = vunpack.c.h.b16 %v609
        %v947 = vunpack.c.l.b16 %v610
        %v948 = vunpack.c.h.b16 %v610
        %v949 = vunpack.c.l.b16 %v611
        %v950 = vunpack.c.h.b16 %v611
        %v951 = vunpack.c.l.b16 %v612
        %v952 = vunpack.c.h.b16 %v612
        %v953 = vunpack.c.l.b16 %v613
        %v954 = vunpack.c.h.b16 %v613
        %v955 = vunpack.c.l.b16 %v614
        %v956 = vunpack.c.h.b16 %v614
        %v957 = vunpack.c.l.b16 %v615
        %v958 = vunpack.c.h.b16 %v615
        %v959 = vunpack.c.l.b16 %v616
        %v960 = vunpack.c.h.b16 %v616
        %v961 = vunpack.c.l.b16 %v617
        %v962 = vunpack.c.h.b16 %v617
        %v963 = vunpack.c.l.b16 %v618
        %v964 = vunpack.c.h.b16 %v618
        %v965 = vunpack.c.l.b16 %v619
        %v966 = vunpack.c.h.b16 %v619
        %v967 = vunpack.c.l.b16 %v620
        %v968 = vunpack.c.h.b16 %v620
        %v969 = vunpack.c.l.b16 %v621
        %v970 = vunpack.c.h.b16 %v621
        %v971 = vunpack.c.l.b16 %v622
        %v972 = vunpack.c.h.b16 %v622
        %v973 = vunpack.c.l.b16 %v623
        %v974 = vunpack.c.h.b16 %v623
        %v975 = vunpack.c.l.b16 %v624
        %v976 = vunpack.c.h.b16 %v624
        %v977 = vunpack.c.l.b16 %v625
        %v978 = vunpack.c.h.b16 %v625
        %v979 = vunpack.c.l.b16 %v626
        %v980 = vunpack.c.h.b16 %v626
        %v981 = vunpack.c.l.b16 %v627
        %v982 = vunpack.c.h.b16 %v627
        %v983 = vunpack.c.l.b16 %v628
        %v984 = vunpack.c.h.b16 %v628
        %v985 = vunpack.c.l.b16 %v629
        %v986 = vunpack.c.h.b16 %v629
        %v987 = vunpack.c.l.b16 %v630
        %v988 = vunpack.c.h.b16 %v630
        %v989 = vunpack.c.l.b16 %v631
        %v990 = vunpack.c.h.b16 %v631
        %v991 = vunpack.c.l.b16 %v632
        %v992 = vunpack.c.h.b16 %v632
        %v993 = vunpack.c.l.b16 %v633
        %v994 = vunpack.c.h.b16 %v633
        %v995 = vunpack.c.l.b16 %v634
        %v996 = vunpack.c.h.b16 %v634
        %v997 = vunpack.c.l.b16 %v635
        %v998 = vunpack.c.h.b16 %v635
        %v999 = vunpack.c.l.b16 %v636
        %v1000 = vunpack.c.h.b16 %v636
        %v1001 = vunpack.c.l.b16 %v637
        %v1002 = vunpack.c.h.b16 %v637
        %v1003 = vunpack.c.l.b16 %v638
        %v1004 = vunpack.c.h.b16 %v638
        %v1005 = vunpack.c.l.b16 %v639
        %v1006 = vunpack.c.h.b16 %v639
        %v1007 = vunpack.c.l.b16 %v640
        %v1008 = vunpack.c.h.b16 %v640
        %v1009 = vunpack.c.l.b16 %v641
        %v1010 = vunpack.c.h.b16 %v641
        %v1011 = vunpack.c.l.b16 %v642
        %v1012 = vunpack.c.h.b16 %v642
        %v1013 = vunpack.c.l.b16 %v643
        %v1014 = vunpack.c.h.b16 %v643
        %v1015 = vunpack.c.l.b16 %v644
        %v1016 = vunpack.c.h.b16 %v644
        %v1017 = vunpack.c.l.b16 %v645
        %v1018 = vunpack.c.h.b16 %v645
        %v1019 = vunpack.c.l.b16 %v646
        %v1020 = vunpack.c.h.b16 %v646
        %v1021 = vunpack.c.l.b16 %v647
        %v1022 = vunpack.c.h.b16 %v647
        %v1023 = vpack.c.b16 %v783, %v779
        %v1024 = vpack.c.b16 %v784, %v780
        %v1025 = vpack.c.b16 %v785, %v781
        %v1026 = vpack.c.b16 %v786, %v782
        %v1027 = vpack.c.b16 %v791, %v787
        %v1028 = vpack.c.b16 %v792, %v788
        %v1029 = vpack.c.b16 %v793, %v789
        %v1030 = vpack.c.b16 %v794, %v790
        %v1031 = vpack.c.b16 %v799, %v795
        %v1032 = vpack.c.b16 %v800, %v796
        %v1033 = vpack.c.b16 %v801, %v797
        %v1034 = vpack.c.b16 %v802, %v798
        %v1035 = vpack.c.b16 %v807, %v803
        %v1036 = vpack.c.b16 %v808, %v804
        %v1037 = vpack.c.b16 %v809, %v805
        %v1038 = vpack.c.b16 %v810, %v806
        %v1039 = vpack.c.b16 %v815, %v811
        %v1040 = vpack.c.b16 %v816, %v812
        %v1041 = vpack.c.b16 %v817, %v813
        %v1042 = vpack.c.b16 %v818, %v814
        %v1043 = vpack.c.b16 %v823, %v819
        %v1044 = vpack.c.b16 %v824, %v820
        %v1045 = vpack.c.b16 %v825, %v821
        %v1046 = vpack.c.b16 %v826, %v822
        %v1047 = vpack.c.b16 %v831, %v827
        %v1048 = vpack.c.b16 %v832, %v828
        %v1049 = vpack.c.b16 %v833, %v829
        %v1050 = vpack.c.b16 %v834, %v830
        %v1051 = vpack.c.b16 %v839, %v835
        %v1052 = vpack.c.b16 %v840, %v836
        %v1053 = vpack.c.b16 %v841, %v837
        %v1054 = vpack.c.b16 %v842, %v838
        %v1055 = vpack.c.b16 %v847, %v843
        %v1056 = vpack.c.b16 %v848, %v844
        %v1057 = vpack.c.b16 %v849, %v845
        %v1058 = vpack.c.b16 %v850, %v846
        %v1059 = vpack.c.b16 %v855, %v851
        %v1060 = vpack.c.b16 %v856, %v852
        %v1061 = vpack.c.b16 %v857, %v853
        %v1062 = vpack.c.b16 %v858, %v854
        %v1063 = vpack.c.b16 %v863, %v859
        %v1064 = vpack.c.b16 %v864, %v860
        %v1065 = vpack.c.b16 %v865, %v861
        %v1066 = vpack.c.b16 %v866, %v862
        %v1067 = vpack.c.b16 %v871, %v867
        %v1068 = vpack.c.b16 %v872, %v868
        %v1069 = vpack.c.b16 %v873, %v869
        %v1070 = vpack.c.b16 %v874, %v870
        %v1071 = vpack.c.b16 %v879, %v875
        %v1072 = vpack.c.b16 %v880, %v876
        %v1073 = vpack.c.b16 %v881, %v877
        %v1074 = vpack.c.b16 %v882, %v878
        %v1075 = vpack.c.b16 %v887, %v883
        %v1076 = vpack.c.b16 %v888, %v884
        %v1077 = vpack.c.b16 %v889, %v885
        %v1078 = vpack.c.b16 %v890, %v886
        %v1079 = vpack.c.b16 %v895, %v891
        %v1080 = vpack.c.b16 %v896, %v892
        %v1081 = vpack.c.b16 %v897, %v893
        %v1082 = vpack.c.b16 %v898, %v894
        %v1083 = vpack.c.b16 %v903, %v899
        %v1084 = vpack.c.b16 %v904, %v900
        %v1085 = vpack.c.b16 %v905, %v901
        %v1086 = vpack.c.b16 %v906, %v902
        %v1087 = vpack.c.b16 %v911, %v907
        %v1088 = vpack.c.b16 %v912, %v908
        %v1089 = vpack.c.b16 %v913, %v909
        %v1090 = vpack.c.b16 %v914, %v910
        %v1091 = vpack.c.b16 %v919, %v915
        %v1092 = vpack.c.b16 %v920, %v916
        %v1093 = vpack.c.b16 %v921, %v917
        %v1094 = vpack.c.b16 %v922, %v918
        %v1095 = vpack.c.b16 %v927, %v923
        %v1096 = vpack.c.b16 %v928, %v924
        %v1097 = vpack.c.b16 %v929, %v925
        %v1098 = vpack.c.b16 %v930, %v926
        %v1099 = vpack.c.b16 %v935, %v931
        %v1100 = vpack.c.b16 %v936, %v932
        %v1101 = vpack.c.b16 %v937, %v933
        %v1102 = vpack.c.b16 %v938, %v934
        %v1103 = vpack.c.b16 %v943, %v939
        %v1104 = vpack.c.b16 %v944, %v940
        %v1105 = vpack.c.b16 %v945, %v941
        %v1106 = vpack.c.b16 %v946, %v942
        %v1107 = vpack.c.b16 %v951, %v947
        %v1108 = vpack.c.b16 %v952, %v948
        %v1109 = vpack.c.b16 %v953, %v949
        %v1110 = vpack.c.b16 %v954, %v950
        %v1111 = vpack.c.b16 %v959, %v955
        %v1112 = vpack.c.b16 %v960, %v956
        %v1113 = vpack.c.b16 %v961, %v957
        %v1114 = vpack.c.b16 %v962, %v958
        %v1115 = vpack.c.b16 %v967, %v963
        %v1116 = vpack.c.b16 %v968, %v964
        %v1117 = vpack.c.b16 %v969, %v965
        %v1118 = vpack.c.b16 %v970, %v966
        %v1119 = vpack.c.b16 %v975, %v971
        %v1120 = vpack.c.b16 %v976, %v972
        %v1121 = vpack.c.b16 %v977, %v973
        %v1122 = vpack.c.b16 %v978, %v974
        %v1123 = vpack.c.b16 %v983, %v979
        %v1124 = vpack.c.b16 %v984, %v980
        %v1125 = vpack.c.b16 %v985, %v981
        %v1126 = vpack.c.b16 %v986, %v982
        %v1127 = vpack.c.b16 %v991, %v987
        %v1128 = vpack.c.b16 %v992, %v988
        %v1129 = vpack.c.b16 %v993, %v989
        %v1130 = vpack.c.b16 %v994, %v990
        %v1131 = vpack.c.b16 %v999, %v995
        %v1132 = vpack.c.b16 %v1000, %v996
        %v1133 = vpack.c.b16 %v1001, %v997
        %v1134 = vpack.c.b16 %v1002, %v998
        %v1135 = vpack.c.b16 %v1007, %v1003
        %v1136 = vpack.c.b16 %v1008, %v1004
        %v1137 = vpack.c.b16 %v1009, %v1005
        %v1138 = vpack.c.b16 %v1010, %v1006
        %v1139 = vpack.c.b16 %v1015, %v1011
        %v1140 = vpack.c.b16 %v1016, %v1012
        %v1141 = vpack.c.b16 %v1017, %v1013
        %v1142 = vpack.c.b16 %v1018, %v1014
        %v1143 = vpack.c.b16 %v1019, %v1019
        %v1144 = vpack.c.b16 %v1020, %v1020
        %v1145 = vpack.c.b16 %v1021, %v1021
        %v1146 = vpack.c.b16 %v1022, %v1022
        %vm1267 = vcmask 834560
        %v1268 = vsel %vm1267, %v653, 0
        %vm1270 = vcmask 1042432
        %v1272 = vsel %vm1270, %v1143, 0
        %v1275 = vsel %vm1270, %v1144, 0
        %v1278 = vsel %vm1270, %v1145, 0
        %v1281 = vsel %vm1270, %v1146, 0
        %1283 = vmatpush.bf16.msra.mxu0 %v1051
        %1284 = vmatpush.bf16.msra.mxu0 %v1047
        %1285 = vmatpush.bf16.msra.mxu0 %v1043
        %1286 = vmatpush.bf16.msra.mxu0 %v1039
        %1287 = vmatpush.bf16.msra.mxu0 %v1035
        %1288 = vmatpush.bf16.msra.mxu0 %v1031
        %1289 = vmatpush.bf16.msra.mxu0 %v1027
        %1290 = vmatpush.bf16.msra.mxu0 %v1023
        %1291 = vmatmul.bf16.gmra.mxu0 %v650
        %v1292 = vpop.f32.mrf.mxu0
        %v1293 = vadd.f32 0.0, %v1292
        %v1294 = vpop.f32.mrf.mxu0
        %1295 = vdwg.mxu0
        %1296 = vmatpush.bf16.msra.mxu0 %v1083
        %1297 = vmatpush.bf16.msra.mxu0 %v1079
        %1298 = vmatpush.bf16.msra.mxu0 %v1075
        %1299 = vmatpush.bf16.msra.mxu0 %v1071
        %1300 = vmatpush.bf16.msra.mxu0 %v1067
        %1301 = vmatpush.bf16.msra.mxu0 %v1063
        %1302 = vmatpush.bf16.msra.mxu0 %v1059
        %1303 = vmatpush.bf16.msra.mxu0 %v1055
        %1304 = vmatmul.bf16.gmra.mxu0 %v651
        %v1305 = vpop.f32.mrf.mxu0
        %v1306 = vadd.f32 %v1293, %v1305
        %v1307 = vpop.f32.mrf.mxu0
        %1308 = vdwg.mxu0
        %1309 = vmatpush.bf16.msra.mxu0 %v1115
        %1310 = vmatpush.bf16.msra.mxu0 %v1111
        %1311 = vmatpush.bf16.msra.mxu0 %v1107
        %1312 = vmatpush.bf16.msra.mxu0 %v1103
        %1313 = vmatpush.bf16.msra.mxu0 %v1099
        %1314 = vmatpush.bf16.msra.mxu0 %v1095
        %1315 = vmatpush.bf16.msra.mxu0 %v1091
        %1316 = vmatpush.bf16.msra.mxu0 %v1087
        %1317 = vmatmul.bf16.gmra.mxu0 %v652
        %v1318 = vpop.f32.mrf.mxu0
        %v1319 = vadd.f32 %v1306, %v1318
        %v1320 = vpop.f32.mrf.mxu0
        %1321 = vdwg.mxu0
        %1322 = vmatpush.bf16.msra.mxu0 0
        %1323 = vmatpush.bf16.msra.mxu0 %v1272
        %1324 = vmatpush.bf16.msra.mxu0 %v1139
        %1325 = vmatpush.bf16.msra.mxu0 %v1135
        %1326 = vmatpush.bf16.msra.mxu0 %v1131
        %1327 = vmatpush.bf16.msra.mxu0 %v1127
        %1328 = vmatpush.bf16.msra.mxu0 %v1123
        %1329 = vmatpush.bf16.msra.mxu0 %v1119
        %1330 = vmatmul.bf16.gmra.mxu0 %v1268
        %v1331 = vpop.f32.mrf.mxu0
        %v1332 = vadd.f32 %v1319, %v1331
        %v1333 = vpop.f32.mrf.mxu0
        %1334 = vdwg.mxu0
        %1335 = vmatpush.bf16.msra.mxu0 %v1052
        %1336 = vmatpush.bf16.msra.mxu0 %v1048
        %1337 = vmatpush.bf16.msra.mxu0 %v1044
        %1338 = vmatpush.bf16.msra.mxu0 %v1040
        %1339 = vmatpush.bf16.msra.mxu0 %v1036
        %1340 = vmatpush.bf16.msra.mxu0 %v1032
        %1341 = vmatpush.bf16.msra.mxu0 %v1028
        %1342 = vmatpush.bf16.msra.mxu0 %v1024
        %1343 = vmatmul.bf16.gmra.mxu0 %v650
        %v1344 = vpop.f32.mrf.mxu0
        %v1345 = vadd.f32 0.0, %v1344
        %v1346 = vpop.f32.mrf.mxu0
        %1347 = vdwg.mxu0
        %1348 = vmatpush.bf16.msra.mxu0 %v1084
        %1349 = vmatpush.bf16.msra.mxu0 %v1080
        %1350 = vmatpush.bf16.msra.mxu0 %v1076
        %1351 = vmatpush.bf16.msra.mxu0 %v1072
        %1352 = vmatpush.bf16.msra.mxu0 %v1068
        %1353 = vmatpush.bf16.msra.mxu0 %v1064
        %1354 = vmatpush.bf16.msra.mxu0 %v1060
        %1355 = vmatpush.bf16.msra.mxu0 %v1056
        %1356 = vmatmul.bf16.gmra.mxu0 %v651
        %v1357 = vpop.f32.mrf.mxu0
        %v1358 = vadd.f32 %v1345, %v1357
        %v1359 = vpop.f32.mrf.mxu0
        %1360 = vdwg.mxu0
        %1361 = vmatpush.bf16.msra.mxu0 %v1116
        %1362 = vmatpush.bf16.msra.mxu0 %v1112
        %1363 = vmatpush.bf16.msra.mxu0 %v1108
        %1364 = vmatpush.bf16.msra.mxu0 %v1104
        %1365 = vmatpush.bf16.msra.mxu0 %v1100
        %1366 = vmatpush.bf16.msra.mxu0 %v1096
        %1367 = vmatpush.bf16.msra.mxu0 %v1092
        %1368 = vmatpush.bf16.msra.mxu0 %v1088
        %1369 = vmatmul.bf16.gmra.mxu0 %v652
        %v1370 = vpop.f32.mrf.mxu0
        %v1371 = vadd.f32 %v1358, %v1370
        %v1372 = vpop.f32.mrf.mxu0
        %1373 = vdwg.mxu0
        %1374 = vmatpush.bf16.msra.mxu0 0
        %1375 = vmatpush.bf16.msra.mxu0 %v1275
        %1376 = vmatpush.bf16.msra.mxu0 %v1140
        %1377 = vmatpush.bf16.msra.mxu0 %v1136
        %1378 = vmatpush.bf16.msra.mxu0 %v1132
        %1379 = vmatpush.bf16.msra.mxu0 %v1128
        %1380 = vmatpush.bf16.msra.mxu0 %v1124
        %1381 = vmatpush.bf16.msra.mxu0 %v1120
        %1382 = vmatmul.bf16.gmra.mxu0 %v1268
        %v1383 = vpop.f32.mrf.mxu0
        %v1384 = vadd.f32 %v1371, %v1383
        %v1385 = vpop.f32.mrf.mxu0
        %1386 = vdwg.mxu0
        %1387 = vmatpush.bf16.msra.mxu0 %v1053
        %1388 = vmatpush.bf16.msra.mxu0 %v1049
        %1389 = vmatpush.bf16.msra.mxu0 %v1045
        %1390 = vmatpush.bf16.msra.mxu0 %v1041
        %1391 = vmatpush.bf16.msra.mxu0 %v1037
        %1392 = vmatpush.bf16.msra.mxu0 %v1033
        %1393 = vmatpush.bf16.msra.mxu0 %v1029
        %1394 = vmatpush.bf16.msra.mxu0 %v1025
        %1395 = vmatmul.bf16.gmra.mxu0 %v650
        %v1396 = vpop.f32.mrf.mxu0
        %v1397 = vadd.f32 0.0, %v1396
        %v1398 = vpop.f32.mrf.mxu0
        %1399 = vdwg.mxu0
        %1400 = vmatpush.bf16.msra.mxu0 %v1085
        %1401 = vmatpush.bf16.msra.mxu0 %v1081
        %1402 = vmatpush.bf16.msra.mxu0 %v1077
        %1403 = vmatpush.bf16.msra.mxu0 %v1073
        %1404 = vmatpush.bf16.msra.mxu0 %v1069
        %1405 = vmatpush.bf16.msra.mxu0 %v1065
        %1406 = vmatpush.bf16.msra.mxu0 %v1061
        %1407 = vmatpush.bf16.msra.mxu0 %v1057
        %1408 = vmatmul.bf16.gmra.mxu0 %v651
        %v1409 = vpop.f32.mrf.mxu0
        %v1410 = vadd.f32 %v1397, %v1409
        %v1411 = vpop.f32.mrf.mxu0
        %1412 = vdwg.mxu0
        %1413 = vmatpush.bf16.msra.mxu0 %v1117
        %1414 = vmatpush.bf16.msra.mxu0 %v1113
        %1415 = vmatpush.bf16.msra.mxu0 %v1109
        %1416 = vmatpush.bf16.msra.mxu0 %v1105
        %1417 = vmatpush.bf16.msra.mxu0 %v1101
        %1418 = vmatpush.bf16.msra.mxu0 %v1097
        %1419 = vmatpush.bf16.msra.mxu0 %v1093
        %1420 = vmatpush.bf16.msra.mxu0 %v1089
        %1421 = vmatmul.bf16.gmra.mxu0 %v652
        %v1422 = vpop.f32.mrf.mxu0
        %v1423 = vadd.f32 %v1410, %v1422
        %v1424 = vpop.f32.mrf.mxu0
        %1425 = vdwg.mxu0
        %1426 = vmatpush.bf16.msra.mxu0 0
        %1427 = vmatpush.bf16.msra.mxu0 %v1278
        %1428 = vmatpush.bf16.msra.mxu0 %v1141
        %1429 = vmatpush.bf16.msra.mxu0 %v1137
        %1430 = vmatpush.bf16.msra.mxu0 %v1133
        %1431 = vmatpush.bf16.msra.mxu0 %v1129
        %1432 = vmatpush.bf16.msra.mxu0 %v1125
        %1433 = vmatpush.bf16.msra.mxu0 %v1121
        %1434 = vmatmul.bf16.gmra.mxu0 %v1268
        %v1435 = vpop.f32.mrf.mxu0
        %v1436 = vadd.f32 %v1423, %v1435
        %v1437 = vpop.f32.mrf.mxu0
        %1438 = vdwg.mxu0
        %1439 = vmatpush.bf16.msra.mxu0 %v1054
        %1440 = vmatpush.bf16.msra.mxu0 %v1050
        %1441 = vmatpush.bf16.msra.mxu0 %v1046
        %1442 = vmatpush.bf16.msra.mxu0 %v1042
        %1443 = vmatpush.bf16.msra.mxu0 %v1038
        %1444 = vmatpush.bf16.msra.mxu0 %v1034
        %1445 = vmatpush.bf16.msra.mxu0 %v1030
        %1446 = vmatpush.bf16.msra.mxu0 %v1026
        %1447 = vmatmul.bf16.gmra.mxu0 %v650
        %v1448 = vpop.f32.mrf.mxu0
        %v1449 = vadd.f32 0.0, %v1448
        %v1450 = vpop.f32.mrf.mxu0
        %1451 = vdwg.mxu0
        %1452 = vmatpush.bf16.msra.mxu0 %v1086
        %1453 = vmatpush.bf16.msra.mxu0 %v1082
        %1454 = vmatpush.bf16.msra.mxu0 %v1078
        %1455 = vmatpush.bf16.msra.mxu0 %v1074
        %1456 = vmatpush.bf16.msra.mxu0 %v1070
        %1457 = vmatpush.bf16.msra.mxu0 %v1066
        %1458 = vmatpush.bf16.msra.mxu0 %v1062
        %1459 = vmatpush.bf16.msra.mxu0 %v1058
        %1460 = vmatmul.bf16.gmra.mxu0 %v651
        %v1461 = vpop.f32.mrf.mxu0
        %v1462 = vadd.f32 %v1449, %v1461
        %v1463 = vpop.f32.mrf.mxu0
        %1464 = vdwg.mxu0
        %1465 = vmatpush.bf16.msra.mxu0 %v1118
        %1466 = vmatpush.bf16.msra.mxu0 %v1114
        %1467 = vmatpush.bf16.msra.mxu0 %v1110
        %1468 = vmatpush.bf16.msra.mxu0 %v1106
        %1469 = vmatpush.bf16.msra.mxu0 %v1102
        %1470 = vmatpush.bf16.msra.mxu0 %v1098
        %1471 = vmatpush.bf16.msra.mxu0 %v1094
        %1472 = vmatpush.bf16.msra.mxu0 %v1090
        %1473 = vmatmul.bf16.gmra.mxu0 %v652
        %v1474 = vpop.f32.mrf.mxu0
        %v1475 = vadd.f32 %v1462, %v1474
        %v1476 = vpop.f32.mrf.mxu0
        %1477 = vdwg.mxu0
        %1478 = vmatpush.bf16.msra.mxu0 0
        %1479 = vmatpush.bf16.msra.mxu0 %v1281
        %1480 = vmatpush.bf16.msra.mxu0 %v1142
        %1481 = vmatpush.bf16.msra.mxu0 %v1138
        %1482 = vmatpush.bf16.msra.mxu0 %v1134
        %1483 = vmatpush.bf16.msra.mxu0 %v1130
        %1484 = vmatpush.bf16.msra.mxu0 %v1126
        %1485 = vmatpush.bf16.msra.mxu0 %v1122
        %1486 = vmatmul.bf16.gmra.mxu0 %v1268
        %v1487 = vpop.f32.mrf.mxu0
        %v1488 = vadd.f32 %v1475, %v1487
        %v1489 = vpop.f32.mrf.mxu0
        %1490 = vdwg.mxu0
        %v1491 = vadd.f32 %v507, %v1332
        %v1492 = vadd.f32 %v508, %v1384
        %v1493 = vadd.f32 %v509, %v1436
        %v1494 = vadd.f32 %v510, %v1488
        %v1499 = vrot.slane %v1492, 6
        %v1500 = vrot.slane %v1493, 4
        %v1501 = vrot.slane %v1494, 2
        %v1502 = vsel %vm433, %v1491, %v1499
        %v1503 = vsel %vm519, %v1500, %v1501
        %v1504 = vsel %vm521, %v1502, %v1503
        %1506 = vst [vmem:[%s384] sm:$0xff] %v1504
        %s1507 = sand.u32 %s154, 1
        %s1508 = scalar_lea.sflag [#allocation4], %s1507
        %s1509 = sand.u32 %s154, 1
        %s1510 = smul.addr %s1509, 8
        %s1511 = scalar_lea.vmem [#allocation10], %s1510
        %s1512 = sand.u32 %s180, 1
        %s1513 = scalar_lea.sflag [#allocation12], %s1512
        %s1514 = sand.u32 %s180, 1
        %s1515 = smul.addr %s1514, 8
        %s1516 = scalar_lea.vmem [#allocation11], %s1515
        // Predicated region
        $region61: #{tpu_custom_call.1} parent=39 // pred_check
          %p1517 = pneg %p164
        $region62: #{tpu_custom_call.1} parent=39 // pred_check_branch
          %1519 = sbr.rel (%p1517) target = $region64
        $region63: #{tpu_custom_call.1} parent=39 // pred_region
          %s1520 = smul.u32 4, %s26
          %1522 = vsyncadd %s1508, 0
          %s1523 = smul.addr %s1520, 2
          %s1524 = scalar_lea.hbm %s5, %s1523
          %s1526 = sshll.u32 %s1511, 4
          %s1527 = int_to_ptr.vmem [resolvable:$true] %s1526
          %s1528 = sshll.u32 %s1524, 4
          %s1529 = int_to_ptr.hbm [resolvable:$true] %s1528
          %1531 = dma.vmem_to_hbm [thread:$0]  %s1527, 128, %s1529, %s1508
        $region64: #{tpu_custom_call.1} parent=39 // pred_fallthru
          _
        // Predicated region
        $region65: #{tpu_custom_call.1} parent=39 // pred_check
          %p1532 = pneg %p190
        $region66: #{tpu_custom_call.1} parent=39 // pred_check_branch
          %1534 = sbr.rel (%p1532) target = $region68
        $region67: #{tpu_custom_call.1} parent=39 // pred_region
          %s1535 = smul.u32 4, %s26
          %1537 = vsyncadd %s1513, 0
          %s1538 = smul.addr %s1535, 2
          %s1539 = scalar_lea.hbm %s6, %s1538
          %s1541 = sshll.u32 %s1516, 4
          %s1542 = int_to_ptr.vmem [resolvable:$true] %s1541
          %s1543 = sshll.u32 %s1539, 4
          %s1544 = int_to_ptr.hbm [resolvable:$true] %s1543
          %1546 = dma.vmem_to_hbm [thread:$0]  %s1542, 128, %s1544, %s1513
        $region68: #{tpu_custom_call.1} parent=39 // pred_fallthru
          _
      $region40: #{tpu_custom_call.1} parent=5 // pred_fallthru
        _
      %p1547 = scmp.le.s32.totalorder 2, %s21
      // Predicated region
      $region69: #{tpu_custom_call.1} parent=5 // pred_check
        %p1548 = pneg %p1547
      $region70: #{tpu_custom_call.1} parent=5 // pred_check_branch
        %1550 = sbr.rel (%p1548) target = $region72
      $region71: #{tpu_custom_call.1} parent=5 // pred_region
        %s1551 = ssub.s32 %s21, 2
        // Predicated region
        $region73: #{tpu_custom_call.1} parent=71 // pred_check
          %p1552 = pneg %p170
        $region74: #{tpu_custom_call.1} parent=71 // pred_check_branch
          %1554 = sbr.rel (%p1552) target = $region76
        $region75: #{tpu_custom_call.1} parent=71 // pred_region
          %s1555 = sand.u32 %s155, 1
          %s1556 = scalar_lea.sflag [#allocation4], %s1555
          %s1557 = sand.u32 %s155, 1
          %s1558 = smul.addr %s1557, 8
          %s1559 = scalar_lea.vmem [#allocation10], %s1558
          %1561 = dma.done %s1556, 128
        $region76: #{tpu_custom_call.1} parent=71 // pred_fallthru
          _
        // Predicated region
        $region77: #{tpu_custom_call.1} parent=71 // pred_check
          %p1562 = pneg %p196
        $region78: #{tpu_custom_call.1} parent=71 // pred_check_branch
          %1564 = sbr.rel (%p1562) target = $region80
        $region79: #{tpu_custom_call.1} parent=71 // pred_region
          %s1565 = sand.u32 %s181, 1
          %s1566 = scalar_lea.sflag [#allocation12], %s1565
          %s1567 = sand.u32 %s181, 1
          %s1568 = smul.addr %s1567, 8
          %s1569 = scalar_lea.vmem [#allocation11], %s1568
          %1571 = dma.done %s1566, 128
        $region80: #{tpu_custom_call.1} parent=71 // pred_fallthru
          _
      $region72: #{tpu_custom_call.1} parent=5 // pred_fallthru
        _
    $region6: #{tpu_custom_call.1} parent=1 // loop_footer
      %s25 = sadd.s32 1, %s21
    $region7: #{tpu_custom_call.1} parent=1 // loop_footer_branch
      %20 = sbr.rel target = $region3
    $region8: #{tpu_custom_call.1} parent=1 // loop_exit
      _
    %1572 = vsyncpa [#allocation3], 1
    %s1573 = scalar_lea.sflag [#allocation3], 1
    %1574 = vsyncpa %s1573, 1
    %1575 = vsyncpa [#allocation6], 1
    %1576 = vsyncpa [#allocation4], 1
    %s1577 = scalar_lea.sflag [#allocation4], 1
    %1578 = vsyncpa %s1577, 1
    %1579 = vsyncpa [#allocation12], 1
    %s1580 = scalar_lea.sflag [#allocation12], 1
    %1581 = vsyncpa %s1580, 1

</llo_original>
